<compile_context>
chip_gen: v7x
topology: tpu7x:2x2x1
jax: 0.10.0
libtpu: 0.0.40
codegen_flags: <defaults>
</compile_context>

<pallas_src>
import math
import functools

import jax
import jax.numpy as jnp
from jax import lax
from jax.experimental import pallas as pl
from jax.experimental.pallas import tpu as pltpu


def _mha_kernel(q_ref, kv_ref, wq_ref, wk_ref, wv_ref, wo_ref,
                bq_ref, bk_ref, bv_ref, bo_ref,
                out_ref, attnw_ref,
                acc_ref, attnw_acc_ref,
                *, n_heads, head_dim, heads_per_block, approx_recip):
    """One grid step == (one batch element, one Lq tile, one head-block)."""
    g = pl.program_id(2)
    Dh = head_dim
    Hc = heads_per_block
    f32 = jnp.float32

    q = q_ref[0]            # (q_blk, E)  compute dtype
    kv = kv_ref[0]          # (Lk,   E)
    wq = wq_ref[g]          # (E, Hc*Dh)  pre-transposed, 1/sqrt(Dh) folded in
    wk = wk_ref[g]          # (E, Hc*Dh)
    wv = wv_ref[g]          # (E, Hc*Dh)
    wo = wo_ref[g]          # (Hc*Dh, E)  per-block slice of out_proj.T
    cdt = q.dtype

    # --- projections: full-E contraction, lane width Hc*Dh, f32 accumulation ---
    qh = jnp.dot(q, wq, preferred_element_type=f32) + bq_ref[g].astype(f32)    # (q_blk, Hc*Dh)
    kh = jnp.dot(kv, wk, preferred_element_type=f32) + bk_ref[g].astype(f32)   # (Lk,   Hc*Dh)
    vh = jnp.dot(kv, wv, preferred_element_type=f32) + bv_ref[g].astype(f32)   # (Lk,   Hc*Dh)

    qh_c = qh.astype(cdt)
    kh_c = kh.astype(cdt)
    vh_c = vh.astype(cdt)

    # --- per-head scores / softmax / context (unrolled over the head block) ---
    ctx_parts = []
    w_sum = None
    for hc in range(Hc):
        lo = hc * Dh
        qh_h = qh_c[:, lo:lo + Dh]
        kh_h = kh_c[:, lo:lo + Dh]
        vh_h = vh_c[:, lo:lo + Dh]

        # NT dot_general (contract last dims) -> no explicit in-kernel transpose.
        s = lax.dot_general(qh_h, kh_h,
                            dimension_numbers=(((1,), (1,)), ((), ())),
                            preferred_element_type=f32)            # (q_blk, Lk) f32
        m = jnp.max(s, axis=-1, keepdims=True)
        p = jnp.exp(s - m)
        denom = jnp.sum(p, axis=-1, keepdims=True)
        if approx_recip:
            w = p * pl.reciprocal(denom, approx=True)               # EUP slot
        else:
            w = p / denom                                           # exact (f32 path)

        ctx_parts.append(jnp.dot(w.astype(cdt), vh_h,
                                 preferred_element_type=f32))       # (q_blk, Dh) f32
        w_sum = w if w_sum is None else w_sum + w                   # raw sum, no 1/H

    ctx = ctx_parts[0] if Hc == 1 else jnp.concatenate(ctx_parts, axis=-1)     # (q_blk, Hc*Dh)
    # Single output-projection dot per head-block (K = Hc*Dh on the MXU).
    outc = jnp.dot(ctx.astype(cdt), wo, preferred_element_type=f32)            # (q_blk, E) f32

    @pl.when(g == 0)
    def _init():
        acc_ref[...] = outc
        attnw_acc_ref[...] = w_sum

    @pl.when(g > 0)
    def _accum():
        acc_ref[...] += outc
        attnw_acc_ref[...] += w_sum

    @pl.when(g == pl.num_programs(2) - 1)
    def _finalize():
        out_ref[0] = (acc_ref[...] + bo_ref[...].astype(f32)).astype(out_ref.dtype)
        attnw_ref[0] = (attnw_acc_ref[...] * (1.0 / n_heads)).astype(attnw_ref.dtype)


def _pick_head_block(n_heads, head_dim, target_lanes=256):
    """Smallest divisor Hc of n_heads with Hc*head_dim >= target; else all heads."""
    for hc in range(1, n_heads + 1):
        if n_heads % hc == 0 and hc * head_dim >= target_lanes:
            return hc
    return n_heads


def segment_cross_attention(query, keyval, params, n_heads, *,
                            compute_dtype=None, head_block=None, q_block=None,
                            attn_weights_dtype=jnp.float32):
    """query: (B, Lq, E), keyval: (B, Lk, E).  Returns (out, attn_weights)."""
    B, Lq, E = query.shape
    Bk, Lk, Ek = keyval.shape
    assert Bk == B and Ek == E
    assert E % n_heads == 0
    H = n_heads
    Dh = E // H
    scale = 1.0 / math.sqrt(Dh)

    out_dtype = query.dtype
    cdt = compute_dtype if compute_dtype is not None else query.dtype

    # Head blocking: Hc heads per grid step (Hc*Dh >= 256 when possible; at tiny
    # shapes all heads collapse into a single step).
    Hc = head_block if head_block is not None else _pick_head_block(H, Dh)
    assert H % Hc == 0
    Hb = H // Hc
    Nc = Hc * Dh

    # Optional Lq tiling (second "parallel" axis) for large Lq / small-VMEM chips.
    q_blk = q_block if q_block is not None else Lq
    assert Lq % q_blk == 0
    assert q_blk == Lq or q_blk % 8 == 0, "Lq tile must be full Lq or a multiple of 8"
    Tq = Lq // q_blk

    q = query.astype(cdt)
    kv = keyval.astype(cdt)

    # ---- wrapper-side weight prep (once, plain XLA layout work) ----
    # Per-head, pre-transposed, grouped into head-blocks of Hc heads; 1/sqrt(Dh)
    # folded into Wq/bq.  Kernel never transposes or lane-extracts weights.
    def _block_proj(w):  # (E_out, E_in) -> (Hb, E_in, Hc*Dh)
        per_head = jnp.transpose(w.reshape(H, Dh, E), (0, 2, 1))          # (H, E, Dh)
        return (per_head.reshape(Hb, Hc, E, Dh)
                .transpose(0, 2, 1, 3)
                .reshape(Hb, E, Nc))

    wq_hb = (_block_proj(params["wq"]) * scale).astype(cdt)               # (Hb, E, Nc)
    wk_hb = _block_proj(params["wk"]).astype(cdt)                         # (Hb, E, Nc)
    wv_hb = _block_proj(params["wv"]).astype(cdt)                         # (Hb, E, Nc)
    wo_hb = params["wo"].T.reshape(Hb, Nc, E).astype(cdt)                 # (Hb, Nc, E)

    bq_hb = (params["bq"] * scale).reshape(Hb, 1, Nc).astype(jnp.float32)
    bk_hb = params["bk"].reshape(Hb, 1, Nc).astype(jnp.float32)
    bv_hb = params["bv"].reshape(Hb, 1, Nc).astype(jnp.float32)
    bo = params["bo"].reshape(1, E).astype(jnp.float32)

    approx_recip = jnp.dtype(cdt) != jnp.dtype(jnp.float32)
    kernel = functools.partial(_mha_kernel, n_heads=H, head_dim=Dh,
                               heads_per_block=Hc, approx_recip=approx_recip)

    grid_spec = pltpu.PrefetchScalarGridSpec(
        num_scalar_prefetch=0,
        grid=(B, Tq, Hb),                 # head-block (reduction) axis last
        in_specs=[
            pl.BlockSpec((1, q_blk, E), lambda b, t, g: (b, t, 0)),   # query tile (resident over g)
            pl.BlockSpec((1, Lk, E),    lambda b, t, g: (b, 0, 0)),   # keyval (resident over t, g)
            pl.BlockSpec((Hb, E, Nc),   lambda b, t, g: (0, 0, 0)),   # Wq  (grid-resident slab)
            pl.BlockSpec((Hb, E, Nc),   lambda b, t, g: (0, 0, 0)),   # Wk
            pl.BlockSpec((Hb, E, Nc),   lambda b, t, g: (0, 0, 0)),   # Wv
            pl.BlockSpec((Hb, Nc, E),   lambda b, t, g: (0, 0, 0)),   # Wo
            pl.BlockSpec((Hb, 1, Nc),   lambda b, t, g: (0, 0, 0)),   # bq (scaled)
            pl.BlockSpec((Hb, 1, Nc),   lambda b, t, g: (0, 0, 0)),   # bk
            pl.BlockSpec((Hb, 1, Nc),   lambda b, t, g: (0, 0, 0)),   # bv
            pl.BlockSpec((1, E),        lambda b, t, g: (0, 0)),      # bo
        ],
        out_specs=[
            pl.BlockSpec((1, q_blk, E),  lambda b, t, g: (b, t, 0)),  # out
            pl.BlockSpec((1, q_blk, Lk), lambda b, t, g: (b, t, 0)),  # attn weights (head-avg)
        ],
        scratch_shapes=[
            pltpu.VMEM((q_blk, E), jnp.float32),    # f32 output accumulator
            pltpu.VMEM((q_blk, Lk), jnp.float32),   # f32 attn-weight accumulator
        ],
    )

    # ---- per-generation VMEM budget: 2x inputs + 2x outputs + scratch ----
    isz = jnp.dtype(cdt).itemsize
    o_isz = jnp.dtype(out_dtype).itemsize
    aw_isz = jnp.dtype(attn_weights_dtype).itemsize
    act_bytes = (q_blk * E + Lk * E) * isz
    weight_bytes = 4 * E * E * isz + 4 * E * 4            # proj/out weights + f32 biases
    out_bytes = q_blk * E * o_isz + q_blk * Lk * aw_isz
    scratch_bytes = (q_blk * E + q_blk * Lk) * 4
    budget = (2 * act_bytes + 2 * weight_bytes + 2 * out_bytes
              + scratch_bytes + (2 << 20))                 # +2 MiB headroom
    try:
        phys = int(pltpu.get_tpu_info().vmem_capacity_bytes)
    except Exception:
        phys = 64 * 1024 * 1024                            # v7x-safe fallback
    cap = int(phys * 0.625)                                # ~40 MiB on v7x, ~80 MiB on v5e/v6e
    vmem_limit = int(min(cap, max(16 * 1024 * 1024, budget)))

    out_shapes = (
        jax.ShapeDtypeStruct((B, Lq, E), out_dtype),
        jax.ShapeDtypeStruct((B, Lq, Lk), attn_weights_dtype),
    )

    return pl.pallas_call(
        kernel,
        out_shape=out_shapes,
        grid_spec=grid_spec,
        compiler_params=pltpu.CompilerParams(
            dimension_semantics=("parallel", "parallel", "arbitrary"),
            vmem_limit_bytes=vmem_limit,
        ),
    )(q, kv, wq_hb, wk_hb, wv_hb, wo_hb, bq_hb, bk_hb, bv_hb, bo)


def _reference(query, keyval, params, n_heads):
    """Plain-JAX replica of torch.nn.MultiheadAttention forward (batch_first)."""
    B, Lq, E = query.shape
    Lk = keyval.shape[1]
    Dh = E // n_heads
    scale = 1.0 / math.sqrt(Dh)

    qp = query @ params["wq"].T + params["bq"]
    kp = keyval @ params["wk"].T + params["bk"]
    vp = keyval @ params["wv"].T + params["bv"]

    qp = qp.reshape(B, Lq, n_heads, Dh).transpose(0, 2, 1, 3)
    kp = kp.reshape(B, Lk, n_heads, Dh).transpose(0, 2, 1, 3)
    vp = vp.reshape(B, Lk, n_heads, Dh).transpose(0, 2, 1, 3)

    s = jnp.einsum("bhqd,bhkd->bhqk", qp * scale, kp)
    w = jax.nn.softmax(s, axis=-1)
    ctx = jnp.einsum("bhqk,bhkd->bhqd", w, vp)
    ctx = ctx.transpose(0, 2, 1, 3).reshape(B, Lq, E)
    out = ctx @ params["wo"].T + params["bo"]
    attn_w = w.mean(axis=1)  # average over heads (PyTorch default)
    return out, attn_w


def _init_params(key, embed_dim):
    """Deterministic synthetic init (shapes follow nn.MultiheadAttention)."""
    ks = jax.random.split(key, 8)
    E = embed_dim
    f = 0.1
    return {
        "wq": f * jax.random.normal(ks[0], (E, E), jnp.float32),
        "wk": f * jax.random.normal(ks[1], (E, E), jnp.float32),
        "wv": f * jax.random.normal(ks[2], (E, E), jnp.float32),
        "bq": f * jax.random.normal(ks[3], (E,), jnp.float32),
        "bk": f * jax.random.normal(ks[4], (E,), jnp.float32),
        "bv": f * jax.random.normal(ks[5], (E,), jnp.float32),
        "wo": f * jax.random.normal(ks[6], (E, E), jnp.float32),
        "bo": f * jax.random.normal(ks[7], (E,), jnp.float32),
    }


if __name__ == "__main__":
    B, Lq, Lk, E, H = 2, 8, 16, 32, 4

    key = jax.random.PRNGKey(0)
    kq, kk, kp = jax.random.split(key, 3)
    query = jax.random.normal(kq, (B, Lq, E), jnp.float32)
    keyval = jax.random.normal(kk, (B, Lk, E), jnp.float32)
    params = _init_params(kp, E)

    # f32 path (matches the PyTorch module's default dtype).  At these tiny
    # shapes all 4 heads collapse into a single head-block -> grid = (B, 1, 1).
    out, attn_w = segment_cross_attention(query, keyval, params, H)
    out = jax.block_until_ready(out)
    attn_w = jax.block_until_ready(attn_w)

    ref_out, ref_w = _reference(query, keyval, params, H)
    assert out.shape == (B, Lq, E) and attn_w.shape == (B, Lq, Lk)
    assert jnp.allclose(out, ref_out, atol=3e-4, rtol=3e-3), \
        float(jnp.max(jnp.abs(out - ref_out)))
    assert jnp.allclose(attn_w, ref_w, atol=5e-5, rtol=3e-3), \
        float(jnp.max(jnp.abs(attn_w - ref_w)))

    # bf16 MXU fast path (bf16 operands on the MXU, f32 accumulation, f32
    # softmax with EUP approximate reciprocal) -- relaxed tolerances.
    out16, w16 = segment_cross_attention(query, keyval, params, H,
                                         compute_dtype=jnp.bfloat16)
    out16 = jax.block_until_ready(out16)
    w16 = jax.block_until_ready(w16)
    assert jnp.allclose(out16.astype(jnp.float32), ref_out, atol=3e-2, rtol=3e-2)
    assert jnp.allclose(w16.astype(jnp.float32), ref_w, atol=3e-2, rtol=3e-2)

    print("KERNEL_OK")
</pallas_src>

<mosaic_0001>
module attributes {stable_mosaic.version = 11 : i64} {
  func.func @_mha_kernel(%arg0: i32, %arg1: i32, %arg2: i32, %arg3: memref<1x8x32xf32, #tpu.memory_space<vmem>>, %arg4: memref<1x16x32xf32, #tpu.memory_space<vmem>>, %arg5: memref<1x32x32xf32, #tpu.memory_space<vmem>>, %arg6: memref<1x32x32xf32, #tpu.memory_space<vmem>>, %arg7: memref<1x32x32xf32, #tpu.memory_space<vmem>>, %arg8: memref<1x32x32xf32, #tpu.memory_space<vmem>>, %arg9: memref<1x1x32xf32, #tpu.memory_space<vmem>>, %arg10: memref<1x1x32xf32, #tpu.memory_space<vmem>>, %arg11: memref<1x1x32xf32, #tpu.memory_space<vmem>>, %arg12: memref<1x32xf32, #tpu.memory_space<vmem>>, %arg13: memref<1x8x32xf32, #tpu.memory_space<vmem>>, %arg14: memref<1x8x16xf32, #tpu.memory_space<vmem>>, %arg15: memref<8x32xf32, #tpu.memory_space<vmem>>, %arg16: memref<8x16xf32, #tpu.memory_space<vmem>>) attributes {dimension_semantics = [#tpu.dimension_semantics<parallel>, #tpu.dimension_semantics<parallel>, #tpu.dimension_semantics<arbitrary>], iteration_bounds = array<i64: 2, 1, 1>, scalar_prefetch = 0 : i64, scratch_operands = 2 : i64, tpu.core_type = #tpu.core_type<tc>, window_params = [{transform_indices = @transform_0, window_bounds = array<i64: 1, 8, 32>}, {transform_indices = @transform_1, window_bounds = array<i64: 1, 16, 32>}, {pipeline_mode = #tpu.pipeline_mode<synchronous>, transform_indices = @transform_2, window_bounds = array<i64: 1, 32, 32>}, {pipeline_mode = #tpu.pipeline_mode<synchronous>, transform_indices = @transform_3, window_bounds = array<i64: 1, 32, 32>}, {pipeline_mode = #tpu.pipeline_mode<synchronous>, transform_indices = @transform_4, window_bounds = array<i64: 1, 32, 32>}, {pipeline_mode = #tpu.pipeline_mode<synchronous>, transform_indices = @transform_5, window_bounds = array<i64: 1, 32, 32>}, {pipeline_mode = #tpu.pipeline_mode<synchronous>, transform_indices = @transform_6, window_bounds = array<i64: 1, 1, 32>}, {pipeline_mode = #tpu.pipeline_mode<synchronous>, transform_indices = @transform_7, window_bounds = array<i64: 1, 1, 32>}, {pipeline_mode = #tpu.pipeline_mode<synchronous>, transform_indices = @transform_8, window_bounds = array<i64: 1, 1, 32>}, {pipeline_mode = #tpu.pipeline_mode<synchronous>, transform_indices = @transform_9, window_bounds = array<i64: 1, 32>}, {transform_indices = @transform_10, window_bounds = array<i64: 1, 8, 32>}, {transform_indices = @transform_11, window_bounds = array<i64: 1, 8, 16>}]} {
    %c0 = arith.constant 0 : index
    %c0_0 = arith.constant 0 : index
    %c0_1 = arith.constant 0 : index
    %0 = vector.load %arg3[%c0, %c0_0, %c0_1] : memref<1x8x32xf32, #tpu.memory_space<vmem>>, vector<1x8x32xf32>
    %1 = vector.shape_cast %0 : vector<1x8x32xf32> to vector<8x32xf32>
    %c0_2 = arith.constant 0 : index
    %c0_3 = arith.constant 0 : index
    %c0_4 = arith.constant 0 : index
    %2 = vector.load %arg4[%c0_2, %c0_3, %c0_4] : memref<1x16x32xf32, #tpu.memory_space<vmem>>, vector<1x16x32xf32>
    %3 = vector.shape_cast %2 : vector<1x16x32xf32> to vector<16x32xf32>
    %4 = arith.index_cast %arg2 : i32 to index
    %c0_5 = arith.constant 0 : index
    %c0_6 = arith.constant 0 : index
    %5 = vector.load %arg5[%4, %c0_5, %c0_6] : memref<1x32x32xf32, #tpu.memory_space<vmem>>, vector<1x32x32xf32>
    %6 = vector.shape_cast %5 : vector<1x32x32xf32> to vector<32x32xf32>
    %7 = arith.index_cast %arg2 : i32 to index
    %c0_7 = arith.constant 0 : index
    %c0_8 = arith.constant 0 : index
    %8 = vector.load %arg6[%7, %c0_7, %c0_8] : memref<1x32x32xf32, #tpu.memory_space<vmem>>, vector<1x32x32xf32>
    %9 = vector.shape_cast %8 : vector<1x32x32xf32> to vector<32x32xf32>
    %10 = arith.index_cast %arg2 : i32 to index
    %c0_9 = arith.constant 0 : index
    %c0_10 = arith.constant 0 : index
    %11 = vector.load %arg7[%10, %c0_9, %c0_10] : memref<1x32x32xf32, #tpu.memory_space<vmem>>, vector<1x32x32xf32>
    %12 = vector.shape_cast %11 : vector<1x32x32xf32> to vector<32x32xf32>
    %13 = arith.index_cast %arg2 : i32 to index
    %c0_11 = arith.constant 0 : index
    %c0_12 = arith.constant 0 : index
    %14 = vector.load %arg8[%13, %c0_11, %c0_12] : memref<1x32x32xf32, #tpu.memory_space<vmem>>, vector<1x32x32xf32>
    %15 = vector.shape_cast %14 : vector<1x32x32xf32> to vector<32x32xf32>
    %cst = arith.constant dense<0.000000e+00> : vector<8x32xf32>
    %16 = tpu.matmul %1, %6, %cst {dimension_numbers = #tpu.dot_dimension_numbers<[1], [0], [0], [1], [0, 0, 1, 1], [], []>} : vector<8x32xf32>, vector<32x32xf32>, vector<8x32xf32> -> vector<8x32xf32>
    %17 = arith.index_cast %arg2 : i32 to index
    %c0_13 = arith.constant 0 : index
    %c0_14 = arith.constant 0 : index
    %18 = vector.load %arg9[%17, %c0_13, %c0_14] : memref<1x1x32xf32, #tpu.memory_space<vmem>>, vector<1x1x32xf32>
    %19 = vector.shape_cast %18 : vector<1x1x32xf32> to vector<1x32xf32>
    %20 = vector.broadcast %19 : vector<1x32xf32> to vector<8x32xf32>
    %21 = arith.addf %16, %20 : vector<8x32xf32>
    %cst_15 = arith.constant dense<0.000000e+00> : vector<16x32xf32>
    %22 = tpu.matmul %3, %9, %cst_15 {dimension_numbers = #tpu.dot_dimension_numbers<[1], [0], [0], [1], [0, 0, 1, 1], [], []>} : vector<16x32xf32>, vector<32x32xf32>, vector<16x32xf32> -> vector<16x32xf32>
    %23 = arith.index_cast %arg2 : i32 to index
    %c0_16 = arith.constant 0 : index
    %c0_17 = arith.constant 0 : index
    %24 = vector.load %arg10[%23, %c0_16, %c0_17] : memref<1x1x32xf32, #tpu.memory_space<vmem>>, vector<1x1x32xf32>
    %25 = vector.shape_cast %24 : vector<1x1x32xf32> to vector<1x32xf32>
    %26 = vector.broadcast %25 : vector<1x32xf32> to vector<16x32xf32>
    %27 = arith.addf %22, %26 : vector<16x32xf32>
    %cst_18 = arith.constant dense<0.000000e+00> : vector<16x32xf32>
    %28 = tpu.matmul %3, %12, %cst_18 {dimension_numbers = #tpu.dot_dimension_numbers<[1], [0], [0], [1], [0, 0, 1, 1], [], []>} : vector<16x32xf32>, vector<32x32xf32>, vector<16x32xf32> -> vector<16x32xf32>
    %29 = arith.index_cast %arg2 : i32 to index
    %c0_19 = arith.constant 0 : index
    %c0_20 = arith.constant 0 : index
    %30 = vector.load %arg11[%29, %c0_19, %c0_20] : memref<1x1x32xf32, #tpu.memory_space<vmem>>, vector<1x1x32xf32>
    %31 = vector.shape_cast %30 : vector<1x1x32xf32> to vector<1x32xf32>
    %32 = vector.broadcast %31 : vector<1x32xf32> to vector<16x32xf32>
    %33 = arith.addf %28, %32 : vector<16x32xf32>
    %34 = vector.extract_strided_slice %21 {offsets = [0, 0], sizes = [8, 8], strides = [1, 1]} : vector<8x32xf32> to vector<8x8xf32>
    %35 = vector.extract_strided_slice %27 {offsets = [0, 0], sizes = [16, 8], strides = [1, 1]} : vector<16x32xf32> to vector<16x8xf32>
    %36 = vector.extract_strided_slice %33 {offsets = [0, 0], sizes = [16, 8], strides = [1, 1]} : vector<16x32xf32> to vector<16x8xf32>
    %cst_21 = arith.constant dense<0.000000e+00> : vector<8x16xf32>
    %37 = tpu.matmul %34, %35, %cst_21 {dimension_numbers = #tpu.dot_dimension_numbers<[1], [1], [0], [0], [0, 0, 1, 0], [], []>} : vector<8x8xf32>, vector<16x8xf32>, vector<8x16xf32> -> vector<8x16xf32>
    %cst_22 = arith.constant dense<0xFF800000> : vector<8xf32>
    %38 = vector.multi_reduction <maximumf>, %37, %cst_22 [1] : vector<8x16xf32> to vector<8xf32>
    %39 = vector.shape_cast %38 : vector<8xf32> to vector<8x1xf32>
    %40 = vector.broadcast %39 : vector<8x1xf32> to vector<8x16xf32>
    %41 = arith.subf %37, %40 : vector<8x16xf32>
    %42 = math.exp %41 : vector<8x16xf32>
    %cst_23 = arith.constant dense<0.000000e+00> : vector<8xf32>
    %43 = vector.multi_reduction <add>, %42, %cst_23 [1] : vector<8x16xf32> to vector<8xf32>
    %44 = vector.shape_cast %43 : vector<8xf32> to vector<8x1xf32>
    %45 = vector.broadcast %44 : vector<8x1xf32> to vector<8x16xf32>
    %46 = arith.divf %42, %45 : vector<8x16xf32>
    %cst_24 = arith.constant dense<0.000000e+00> : vector<8x8xf32>
    %47 = tpu.matmul %46, %36, %cst_24 {dimension_numbers = #tpu.dot_dimension_numbers<[1], [0], [0], [1], [0, 0, 1, 1], [], []>} : vector<8x16xf32>, vector<16x8xf32>, vector<8x8xf32> -> vector<8x8xf32>
    %48 = vector.extract_strided_slice %21 {offsets = [0, 8], sizes = [8, 8], strides = [1, 1]} : vector<8x32xf32> to vector<8x8xf32>
    %49 = vector.extract_strided_slice %27 {offsets = [0, 8], sizes = [16, 8], strides = [1, 1]} : vector<16x32xf32> to vector<16x8xf32>
    %50 = vector.extract_strided_slice %33 {offsets = [0, 8], sizes = [16, 8], strides = [1, 1]} : vector<16x32xf32> to vector<16x8xf32>
    %cst_25 = arith.constant dense<0.000000e+00> : vector<8x16xf32>
    %51 = tpu.matmul %48, %49, %cst_25 {dimension_numbers = #tpu.dot_dimension_numbers<[1], [1], [0], [0], [0, 0, 1, 0], [], []>} : vector<8x8xf32>, vector<16x8xf32>, vector<8x16xf32> -> vector<8x16xf32>
    %cst_26 = arith.constant dense<0xFF800000> : vector<8xf32>
    %52 = vector.multi_reduction <maximumf>, %51, %cst_26 [1] : vector<8x16xf32> to vector<8xf32>
    %53 = vector.shape_cast %52 : vector<8xf32> to vector<8x1xf32>
    %54 = vector.broadcast %53 : vector<8x1xf32> to vector<8x16xf32>
    %55 = arith.subf %51, %54 : vector<8x16xf32>
    %56 = math.exp %55 : vector<8x16xf32>
    %cst_27 = arith.constant dense<0.000000e+00> : vector<8xf32>
    %57 = vector.multi_reduction <add>, %56, %cst_27 [1] : vector<8x16xf32> to vector<8xf32>
    %58 = vector.shape_cast %57 : vector<8xf32> to vector<8x1xf32>
    %59 = vector.broadcast %58 : vector<8x1xf32> to vector<8x16xf32>
    %60 = arith.divf %56, %59 : vector<8x16xf32>
    %cst_28 = arith.constant dense<0.000000e+00> : vector<8x8xf32>
    %61 = tpu.matmul %60, %50, %cst_28 {dimension_numbers = #tpu.dot_dimension_numbers<[1], [0], [0], [1], [0, 0, 1, 1], [], []>} : vector<8x16xf32>, vector<16x8xf32>, vector<8x8xf32> -> vector<8x8xf32>
    %62 = arith.addf %46, %60 : vector<8x16xf32>
    %63 = vector.extract_strided_slice %21 {offsets = [0, 16], sizes = [8, 8], strides = [1, 1]} : vector<8x32xf32> to vector<8x8xf32>
    %64 = vector.extract_strided_slice %27 {offsets = [0, 16], sizes = [16, 8], strides = [1, 1]} : vector<16x32xf32> to vector<16x8xf32>
    %65 = vector.extract_strided_slice %33 {offsets = [0, 16], sizes = [16, 8], strides = [1, 1]} : vector<16x32xf32> to vector<16x8xf32>
    %cst_29 = arith.constant dense<0.000000e+00> : vector<8x16xf32>
    %66 = tpu.matmul %63, %64, %cst_29 {dimension_numbers = #tpu.dot_dimension_numbers<[1], [1], [0], [0], [0, 0, 1, 0], [], []>} : vector<8x8xf32>, vector<16x8xf32>, vector<8x16xf32> -> vector<8x16xf32>
    %cst_30 = arith.constant dense<0xFF800000> : vector<8xf32>
    %67 = vector.multi_reduction <maximumf>, %66, %cst_30 [1] : vector<8x16xf32> to vector<8xf32>
    %68 = vector.shape_cast %67 : vector<8xf32> to vector<8x1xf32>
    %69 = vector.broadcast %68 : vector<8x1xf32> to vector<8x16xf32>
    %70 = arith.subf %66, %69 : vector<8x16xf32>
    %71 = math.exp %70 : vector<8x16xf32>
    %cst_31 = arith.constant dense<0.000000e+00> : vector<8xf32>
    %72 = vector.multi_reduction <add>, %71, %cst_31 [1] : vector<8x16xf32> to vector<8xf32>
    %73 = vector.shape_cast %72 : vector<8xf32> to vector<8x1xf32>
    %74 = vector.broadcast %73 : vector<8x1xf32> to vector<8x16xf32>
    %75 = arith.divf %71, %74 : vector<8x16xf32>
    %cst_32 = arith.constant dense<0.000000e+00> : vector<8x8xf32>
    %76 = tpu.matmul %75, %65, %cst_32 {dimension_numbers = #tpu.dot_dimension_numbers<[1], [0], [0], [1], [0, 0, 1, 1], [], []>} : vector<8x16xf32>, vector<16x8xf32>, vector<8x8xf32> -> vector<8x8xf32>
    %77 = arith.addf %62, %75 : vector<8x16xf32>
    %78 = vector.extract_strided_slice %21 {offsets = [0, 24], sizes = [8, 8], strides = [1, 1]} : vector<8x32xf32> to vector<8x8xf32>
    %79 = vector.extract_strided_slice %27 {offsets = [0, 24], sizes = [16, 8], strides = [1, 1]} : vector<16x32xf32> to vector<16x8xf32>
    %80 = vector.extract_strided_slice %33 {offsets = [0, 24], sizes = [16, 8], strides = [1, 1]} : vector<16x32xf32> to vector<16x8xf32>
    %cst_33 = arith.constant dense<0.000000e+00> : vector<8x16xf32>
    %81 = tpu.matmul %78, %79, %cst_33 {dimension_numbers = #tpu.dot_dimension_numbers<[1], [1], [0], [0], [0, 0, 1, 0], [], []>} : vector<8x8xf32>, vector<16x8xf32>, vector<8x16xf32> -> vector<8x16xf32>
    %cst_34 = arith.constant dense<0xFF800000> : vector<8xf32>
    %82 = vector.multi_reduction <maximumf>, %81, %cst_34 [1] : vector<8x16xf32> to vector<8xf32>
    %83 = vector.shape_cast %82 : vector<8xf32> to vector<8x1xf32>
    %84 = vector.broadcast %83 : vector<8x1xf32> to vector<8x16xf32>
    %85 = arith.subf %81, %84 : vector<8x16xf32>
    %86 = math.exp %85 : vector<8x16xf32>
    %cst_35 = arith.constant dense<0.000000e+00> : vector<8xf32>
    %87 = vector.multi_reduction <add>, %86, %cst_35 [1] : vector<8x16xf32> to vector<8xf32>
    %88 = vector.shape_cast %87 : vector<8xf32> to vector<8x1xf32>
    %89 = vector.broadcast %88 : vector<8x1xf32> to vector<8x16xf32>
    %90 = arith.divf %86, %89 : vector<8x16xf32>
    %cst_36 = arith.constant dense<0.000000e+00> : vector<8x8xf32>
    %91 = tpu.matmul %90, %80, %cst_36 {dimension_numbers = #tpu.dot_dimension_numbers<[1], [0], [0], [1], [0, 0, 1, 1], [], []>} : vector<8x16xf32>, vector<16x8xf32>, vector<8x8xf32> -> vector<8x8xf32>
    %92 = arith.addf %77, %90 : vector<8x16xf32>
    %93 = tpu.concatenate %47, %61, %76, %91 in 1 : vector<8x8xf32>, vector<8x8xf32>, vector<8x8xf32>, vector<8x8xf32> -> vector<8x32xf32>
    %cst_37 = arith.constant dense<0.000000e+00> : vector<8x32xf32>
    %94 = tpu.matmul %93, %15, %cst_37 {dimension_numbers = #tpu.dot_dimension_numbers<[1], [0], [0], [1], [0, 0, 1, 1], [], []>} : vector<8x32xf32>, vector<32x32xf32>, vector<8x32xf32> -> vector<8x32xf32>
    %c0_i32 = arith.constant 0 : i32
    %95 = arith.cmpi eq, %arg2, %c0_i32 : i32
    %96 = arith.extui %95 : i1 to i32
    %c0_i32_38 = arith.constant 0 : i32
    %97 = arith.cmpi ne, %96, %c0_i32_38 : i32
    scf.if %97 {
      %c0_43 = arith.constant 0 : index
      %c0_44 = arith.constant 0 : index
      %104 = vector.load %arg15[%c0_43, %c0_44] : memref<8x32xf32, #tpu.memory_space<vmem>>, vector<8x32xf32>
      tpu.vector_store %arg15[%c0_43, %c0_44], %94 {strides = array<i32>} : memref<8x32xf32, #tpu.memory_space<vmem>>, vector<8x32xf32>,
      %c0_45 = arith.constant 0 : index
      %c0_46 = arith.constant 0 : index
      %105 = vector.load %arg16[%c0_45, %c0_46] : memref<8x16xf32, #tpu.memory_space<vmem>>, vector<8x16xf32>
      tpu.vector_store %arg16[%c0_45, %c0_46], %92 {strides = array<i32>} : memref<8x16xf32, #tpu.memory_space<vmem>>, vector<8x16xf32>,
    } else {
    }
    %c0_i32_39 = arith.constant 0 : i32
    %98 = arith.cmpi sgt, %arg2, %c0_i32_39 : i32
    %99 = arith.extui %98 : i1 to i32
    %c0_i32_40 = arith.constant 0 : i32
    %100 = arith.cmpi ne, %99, %c0_i32_40 : i32
    scf.if %100 {
      %c0_43 = arith.constant 0 : index
      %c0_44 = arith.constant 0 : index
      %104 = vector.load %arg15[%c0_43, %c0_44] : memref<8x32xf32, #tpu.memory_space<vmem>>, vector<8x32xf32>
      %105 = arith.addf %104, %94 : vector<8x32xf32>
      %c0_45 = arith.constant 0 : index
      %c0_46 = arith.constant 0 : index
      %106 = vector.load %arg15[%c0_45, %c0_46] : memref<8x32xf32, #tpu.memory_space<vmem>>, vector<8x32xf32>
      tpu.vector_store %arg15[%c0_45, %c0_46], %105 {strides = array<i32>} : memref<8x32xf32, #tpu.memory_space<vmem>>, vector<8x32xf32>,
      %c0_47 = arith.constant 0 : index
      %c0_48 = arith.constant 0 : index
      %107 = vector.load %arg16[%c0_47, %c0_48] : memref<8x16xf32, #tpu.memory_space<vmem>>, vector<8x16xf32>
      %108 = arith.addf %107, %92 : vector<8x16xf32>
      %c0_49 = arith.constant 0 : index
      %c0_50 = arith.constant 0 : index
      %109 = vector.load %arg16[%c0_49, %c0_50] : memref<8x16xf32, #tpu.memory_space<vmem>>, vector<8x16xf32>
      tpu.vector_store %arg16[%c0_49, %c0_50], %108 {strides = array<i32>} : memref<8x16xf32, #tpu.memory_space<vmem>>, vector<8x16xf32>,
    } else {
    }
    %c0_i32_41 = arith.constant 0 : i32
    %101 = arith.cmpi eq, %arg2, %c0_i32_41 : i32
    %102 = arith.extui %101 : i1 to i32
    %c0_i32_42 = arith.constant 0 : i32
    %103 = arith.cmpi ne, %102, %c0_i32_42 : i32
    scf.if %103 {
      %c0_43 = arith.constant 0 : index
      %c0_44 = arith.constant 0 : index
      %104 = vector.load %arg15[%c0_43, %c0_44] : memref<8x32xf32, #tpu.memory_space<vmem>>, vector<8x32xf32>
      %c0_45 = arith.constant 0 : index
      %c0_46 = arith.constant 0 : index
      %105 = vector.load %arg12[%c0_45, %c0_46] : memref<1x32xf32, #tpu.memory_space<vmem>>, vector<1x32xf32>
      %106 = vector.broadcast %105 : vector<1x32xf32> to vector<8x32xf32>
      %107 = arith.addf %104, %106 : vector<8x32xf32>
      %c0_47 = arith.constant 0 : index
      %c0_48 = arith.constant 0 : index
      %c0_49 = arith.constant 0 : index
      %108 = vector.load %arg13[%c0_47, %c0_48, %c0_49] : memref<1x8x32xf32, #tpu.memory_space<vmem>>, vector<1x8x32xf32>
      %109 = vector.shape_cast %108 : vector<1x8x32xf32> to vector<8x32xf32>
      %110 = vector.shape_cast %107 : vector<8x32xf32> to vector<1x8x32xf32>
      tpu.vector_store %arg13[%c0_47, %c0_48, %c0_49], %110 {strides = array<i32>} : memref<1x8x32xf32, #tpu.memory_space<vmem>>, vector<1x8x32xf32>,
      %c0_50 = arith.constant 0 : index
      %c0_51 = arith.constant 0 : index
      %111 = vector.load %arg16[%c0_50, %c0_51] : memref<8x16xf32, #tpu.memory_space<vmem>>, vector<8x16xf32>
      %cst_52 = arith.constant 2.500000e-01 : f32
      %112 = vector.broadcast %cst_52 : f32 to vector<8x16xf32>
      %113 = arith.mulf %111, %112 : vector<8x16xf32>
      %c0_53 = arith.constant 0 : index
      %c0_54 = arith.constant 0 : index
      %c0_55 = arith.constant 0 : index
      %114 = vector.load %arg14[%c0_53, %c0_54, %c0_55] : memref<1x8x16xf32, #tpu.memory_space<vmem>>, vector<1x8x16xf32>
      %115 = vector.shape_cast %114 : vector<1x8x16xf32> to vector<8x16xf32>
      %116 = vector.shape_cast %113 : vector<8x16xf32> to vector<1x8x16xf32>
      tpu.vector_store %arg14[%c0_53, %c0_54, %c0_55], %116 {strides = array<i32>} : memref<1x8x16xf32, #tpu.memory_space<vmem>>, vector<1x8x16xf32>,
    } else {
    }
    return
  }
  func.func @transform_0(%arg0: i32, %arg1: i32, %arg2: i32) -> (i32, i32, i32) {
    %c0_i32 = arith.constant 0 : i32
    %c0_i32_0 = arith.constant 0 : i32
    return %arg0, %arg1, %c0_i32 : i32, i32, i32
  }
  func.func @transform_1(%arg0: i32, %arg1: i32, %arg2: i32) -> (i32, i32, i32) {
    %c0_i32 = arith.constant 0 : i32
    %c0_i32_0 = arith.constant 0 : i32
    %c0_i32_1 = arith.constant 0 : i32
    return %arg0, %c0_i32, %c0_i32_0 : i32, i32, i32
  }
  func.func @transform_2(%arg0: i32, %arg1: i32, %arg2: i32) -> (i32, i32, i32) {
    %c0_i32 = arith.constant 0 : i32
    %c0_i32_0 = arith.constant 0 : i32
    %c0_i32_1 = arith.constant 0 : i32
    %c0_i32_2 = arith.constant 0 : i32
    return %c0_i32, %c0_i32_0, %c0_i32_1 : i32, i32, i32
  }
  func.func @transform_3(%arg0: i32, %arg1: i32, %arg2: i32) -> (i32, i32, i32) {
    %c0_i32 = arith.constant 0 : i32
    %c0_i32_0 = arith.constant 0 : i32
    %c0_i32_1 = arith.constant 0 : i32
    %c0_i32_2 = arith.constant 0 : i32
    return %c0_i32, %c0_i32_0, %c0_i32_1 : i32, i32, i32
  }
  func.func @transform_4(%arg0: i32, %arg1: i32, %arg2: i32) -> (i32, i32, i32) {
    %c0_i32 = arith.constant 0 : i32
    %c0_i32_0 = arith.constant 0 : i32
    %c0_i32_1 = arith.constant 0 : i32
    %c0_i32_2 = arith.constant 0 : i32
    return %c0_i32, %c0_i32_0, %c0_i32_1 : i32, i32, i32
  }
  func.func @transform_5(%arg0: i32, %arg1: i32, %arg2: i32) -> (i32, i32, i32) {
    %c0_i32 = arith.constant 0 : i32
    %c0_i32_0 = arith.constant 0 : i32
    %c0_i32_1 = arith.constant 0 : i32
    %c0_i32_2 = arith.constant 0 : i32
    return %c0_i32, %c0_i32_0, %c0_i32_1 : i32, i32, i32
  }
  func.func @transform_6(%arg0: i32, %arg1: i32, %arg2: i32) -> (i32, i32, i32) {
    %c0_i32 = arith.constant 0 : i32
    %c0_i32_0 = arith.constant 0 : i32
    %c0_i32_1 = arith.constant 0 : i32
    %c0_i32_2 = arith.constant 0 : i32
    return %c0_i32, %c0_i32_0, %c0_i32_1 : i32, i32, i32
  }
  func.func @transform_7(%arg0: i32, %arg1: i32, %arg2: i32) -> (i32, i32, i32) {
    %c0_i32 = arith.constant 0 : i32
    %c0_i32_0 = arith.constant 0 : i32
    %c0_i32_1 = arith.constant 0 : i32
    %c0_i32_2 = arith.constant 0 : i32
    return %c0_i32, %c0_i32_0, %c0_i32_1 : i32, i32, i32
  }
  func.func @transform_8(%arg0: i32, %arg1: i32, %arg2: i32) -> (i32, i32, i32) {
    %c0_i32 = arith.constant 0 : i32
    %c0_i32_0 = arith.constant 0 : i32
    %c0_i32_1 = arith.constant 0 : i32
    %c0_i32_2 = arith.constant 0 : i32
    return %c0_i32, %c0_i32_0, %c0_i32_1 : i32, i32, i32
  }
  func.func @transform_9(%arg0: i32, %arg1: i32, %arg2: i32) -> (i32, i32) {
    %c0_i32 = arith.constant 0 : i32
    %c0_i32_0 = arith.constant 0 : i32
    %c0_i32_1 = arith.constant 0 : i32
    return %c0_i32, %c0_i32_0 : i32, i32
  }
  func.func @transform_10(%arg0: i32, %arg1: i32, %arg2: i32) -> (i32, i32, i32) {
    %c0_i32 = arith.constant 0 : i32
    %c0_i32_0 = arith.constant 0 : i32
    return %arg0, %arg1, %c0_i32 : i32, i32, i32
  }
  func.func @transform_11(%arg0: i32, %arg1: i32, %arg2: i32) -> (i32, i32, i32) {
    %c0_i32 = arith.constant 0 : i32
    %c0_i32_0 = arith.constant 0 : i32
    return %arg0, %arg1, %c0_i32 : i32, i32, i32
  }
}

</mosaic_0001>

<llo_original>
// kernel: tpu_custom_call.1
$region0: #{tpu_custom_call.1}
  #allocation0 [shape = 'u32[]', space=smem, size = 0x4, offset = 0x4, fixed_abs, tag = 'smem constant byte address 0x4 - core index']
  #allocation1 [shape = 'u32[144,128]{1,0:T(1,128)}', space=vmem, size = 0x12000, scoped, tag = 'internal scratch']
  #allocation2 [shape = 'f32[8,32]{1,0:T(8,128)}', space=vmem, size = 0x1000, scoped, tag = 'scratch operand']
  #allocation3 [shape = 'f32[8,16]{1,0:T(8,128)}', space=vmem, size = 0x1000, scoped, tag = 'scratch operand']
  %s0 = inlined_call_operand.hbm [shape: f32[2,8,32], index: 0, kind: input, shape index: {}]
  %s1 = inlined_call_operand.hbm [shape: f32[2,16,32], index: 1, kind: input, shape index: {}]
  %s2 = inlined_call_operand.hbm [shape: f32[1,32,32], index: 2, kind: input, shape index: {}]
  %s3 = inlined_call_operand.hbm [shape: f32[1,32,32], index: 3, kind: input, shape index: {}]
  %s4 = inlined_call_operand.hbm [shape: f32[1,32,32], index: 4, kind: input, shape index: {}]
  %s5 = inlined_call_operand.hbm [shape: f32[1,32,32], index: 5, kind: input, shape index: {}]
  %s6 = inlined_call_operand.vmem [shape: f32[1,1,32], index: 6, kind: input, shape index: {}]
  %s7 = inlined_call_operand.vmem [shape: f32[1,1,32], index: 7, kind: input, shape index: {}]
  %s8 = inlined_call_operand.vmem [shape: f32[1,1,32], index: 8, kind: input, shape index: {}]
  %s9 = inlined_call_operand.vmem [shape: f32[1,32], index: 9, kind: input, shape index: {}]
  %s10 = inlined_call_operand.hbm [shape: f32[2,8,32], index: 10, kind: output, shape index: {0}]
  %s11 = inlined_call_operand.hbm [shape: f32[2,8,16], index: 11, kind: output, shape index: {1}]
  %12 = xla_tuple %s10, %s11
  %s13 = sld [smem:[#allocation0]]
  $region117: #{tpu_custom_call.1} parent=0
    _
  %s15 = ssub.s32 1, %s13
  %s16 = scalar_select 0, %s15, %s13
  $region1: #{tpu_custom_call.1} parent=0
    #allocation4 [shape = 'u8[8192]{0}', space=vmem, size = 0x2000, scoped, tag = 'input window, operand 0']
    #allocation5 [shape = 's32[2]{0}', space=sflag, size = 0x8, scoped, tag = 'scoped memory for tpu_custom_call.1']
    #allocation6 [shape = 's32[2]{0}', space=sflag, size = 0x8, scoped, tag = 'scoped memory for tpu_custom_call.1']
    #allocation7 [shape = 'u8[16384]{0}', space=vmem, size = 0x4000, scoped, tag = 'input window, operand 1']
    #allocation8 [shape = 's32[2]{0}', space=sflag, size = 0x8, scoped, tag = 'scoped memory for tpu_custom_call.1']
    #allocation9 [shape = 'u8[16384]{0}', space=vmem, size = 0x4000, scoped, tag = 'input window, operand 2, single buffered']
    #allocation10 [shape = 'u8[16384]{0}', space=vmem, size = 0x4000, scoped, tag = 'input window, operand 3, single buffered']
    #allocation11 [shape = 's32[1]{0}', space=sflag, size = 0x4, scoped, tag = 'scoped memory for tpu_custom_call.1']
    #allocation12 [shape = 'u8[16384]{0}', space=vmem, size = 0x4000, scoped, tag = 'input window, operand 4, single buffered']
    #allocation13 [shape = 'u8[16384]{0}', space=vmem, size = 0x4000, scoped, tag = 'input window, operand 5, single buffered']
    #allocation14 [shape = 's32[1]{0}', space=sflag, size = 0x4, scoped, tag = 'scoped memory for tpu_custom_call.1']
    #allocation15 [shape = 'u8[8192]{0}', space=vmem, size = 0x2000, scoped, tag = 'output window, operand 0']
    #allocation16 [shape = 'u8[8192]{0}', space=vmem, size = 0x2000, scoped, tag = 'output window, operand 1']
    #allocation17 [shape = 's32[2]{0}', space=sflag, size = 0x8, scoped, tag = 'scoped memory for tpu_custom_call.1']
    %17 = vsyncpa [#allocation5], 0
    %s18 = scalar_lea.sflag [#allocation5], 1
    %19 = vsyncpa %s18, 0
    %20 = vsyncpa [#allocation8], 0
    %s21 = scalar_lea.sflag [#allocation8], 1
    %22 = vsyncpa %s21, 0
    %23 = vsyncpa [#allocation11], 0
    %24 = vsyncpa [#allocation14], 0
    %25 = vsyncpa [#allocation6], 0
    %s26 = scalar_lea.sflag [#allocation6], 1
    %27 = vsyncpa %s26, 0
    %28 = vsyncpa [#allocation17], 0
    %s29 = scalar_lea.sflag [#allocation17], 1
    %30 = vsyncpa %s29, 0
    loop: start=0, step=1, limit=4
    $region2: #{tpu_custom_call.1} parent=1 // loop_pre_header
      _
    $region3: #{tpu_custom_call.1} parent=1 // loop_header
      %s32 = sphi 0, %s36
      %p33 = scmp.ge.s32.totalorder %s32, 4
      %s39 = sphi 0, %s58
      %s40 = sphi 0, %s54
      %s41 = sphi 0, %s50
      %s42 = sphi 0, %s39
      %s43 = sphi 0, %s40
      %s44 = sphi 0, %s41
      %s45 = sphi 0, %s42
      %s46 = sphi 0, %s43
      %s47 = sphi 0, %s44
      %s63 = sphi 0, %s65
      %s66 = sphi 0, %s63
      %s67 = sphi 0, %s66
      %s83 = sphi 0, %s67
      %s89 = sphi 0, %s91
      %s92 = sphi 0, %s89
      %s93 = sphi 0, %s92
      %s109 = sphi 0, %s93
      %s113 = sphi 0, %s113
      %s115 = sphi 0, %s113
      %s116 = sphi 0, %s115
      %s130 = sphi 0, %s116
      %s134 = sphi 0, %s134
      %s136 = sphi 0, %s134
      %s137 = sphi 0, %s136
      %s151 = sphi 0, %s137
      %s155 = sphi 0, %s155
      %s157 = sphi 0, %s155
      %s158 = sphi 0, %s157
      %s172 = sphi 0, %s158
      %s176 = sphi 0, %s176
      %s178 = sphi 0, %s176
      %s179 = sphi 0, %s178
      %s193 = sphi 0, %s179
      %s197 = sphi 0, %s197
      %s199 = sphi 0, %s197
      %s200 = sphi 0, %s199
      %s214 = sphi 0, %s200
      %s218 = sphi 0, %s218
      %s220 = sphi 0, %s218
      %s221 = sphi 0, %s220
      %s235 = sphi 0, %s221
      %s239 = sphi 0, %s239
      %s241 = sphi 0, %s239
      %s242 = sphi 0, %s241
      %s256 = sphi 0, %s242
      %s260 = sphi 0, %s260
      %s262 = sphi 0, %s260
      %s263 = sphi 0, %s262
      %s277 = sphi 0, %s263
      %s285 = sphi 0, %s287
      %s288 = sphi 0, %s285
      %s289 = sphi 0, %s288
      %s305 = sphi 0, %s289
      %s313 = sphi 0, %s315
      %s316 = sphi 0, %s313
      %s317 = sphi 0, %s316
      %s333 = sphi 0, %s317
    $region4: #{tpu_custom_call.1} parent=1 // loop_header_branch
      %35 = sbr.rel (%p33) target = $region8
    $region5: #{tpu_custom_call.1} parent=1 // loop_body
      %s37 = ssub.s32 %s32, 1
      %s38 = ssub.s32 %s32, 2
      %s48 = sadd.s32 1, %s41
      %p49 = scmp.ge.s32.totalorder %s48, 1
      %s50 = scalar_select %p49, 0, %s48
      %s51 = sadd.s32 1, %s40
      %s52 = scalar_select %p49, %s51, %s40
      %p53 = scmp.ge.s32.totalorder %s52, 1
      %s54 = scalar_select %p53, 0, %s52
      %s55 = sadd.s32 1, %s39
      %s56 = scalar_select %p53, %s55, %s39
      %p57 = scmp.ge.s32.totalorder %s56, 2
      %s58 = scalar_select %p57, 0, %s56
      %s59 = ssub.s32 %s39, %s58
      %s60 = ssub.s32 %s40, %s54
      %s61 = sor.u32 %s59, %s60
      %p62 = scmp.eq.s32.totalorder %s61, 0
      %s64 = sadd.s32 %s63, 1
      %s65 = scalar_select %p62, %s63, %s64
      %p68 = pneg %p62
      %p69 = scmp.eq.s32.totalorder %s32, 1
      %p70 = por %p68, %p69
      %p71 = scmp.ne.s32.totalorder %s63, %s66
      %p72 = scmp.eq.s32.totalorder %s32, 0
      %p73 = por %p71, %p72
      %p74 = scmp.ne.s32.totalorder %s63, %s66
      %p75 = scmp.eq.s32.totalorder %s37, 1
      %p76 = por %p74, %p75
      %p77 = scmp.ne.s32.totalorder %s66, %s67
      %p78 = scmp.eq.s32.totalorder %s37, 0
      %p79 = por %p77, %p78
      %p80 = scmp.ne.s32.totalorder %s66, %s67
      %p81 = scmp.eq.s32.totalorder %s38, 1
      %p82 = por %p80, %p81
      %p84 = scmp.ne.s32.totalorder %s67, %s83
      %p85 = scmp.eq.s32.totalorder %s38, 0
      %p86 = por %p84, %p85
      %s87 = ssub.s32 %s39, %s58
      %p88 = scmp.eq.s32.totalorder %s87, 0
      %s90 = sadd.s32 %s89, 1
      %s91 = scalar_select %p88, %s89, %s90
      %p94 = pneg %p88
      %p95 = scmp.eq.s32.totalorder %s32, 1
      %p96 = por %p94, %p95
      %p97 = scmp.ne.s32.totalorder %s89, %s92
      %p98 = scmp.eq.s32.totalorder %s32, 0
      %p99 = por %p97, %p98
      %p100 = scmp.ne.s32.totalorder %s89, %s92
      %p101 = scmp.eq.s32.totalorder %s37, 1
      %p102 = por %p100, %p101
      %p103 = scmp.ne.s32.totalorder %s92, %s93
      %p104 = scmp.eq.s32.totalorder %s37, 0
      %p105 = por %p103, %p104
      %p106 = scmp.ne.s32.totalorder %s92, %s93
      %p107 = scmp.eq.s32.totalorder %s38, 1
      %p108 = por %p106, %p107
      %p110 = scmp.ne.s32.totalorder %s93, %s109
      %p111 = scmp.eq.s32.totalorder %s38, 0
      %p112 = por %p110, %p111
      %s114 = sadd.s32 %s113, 1
      %p117 = scmp.eq.s32.totalorder %s32, 1
      %p118 = scmp.ne.s32.totalorder %s113, %s115
      %p119 = scmp.eq.s32.totalorder %s32, 0
      %p120 = por %p118, %p119
      %p121 = scmp.ne.s32.totalorder %s113, %s115
      %p122 = scmp.eq.s32.totalorder %s37, 1
      %p123 = por %p121, %p122
      %p124 = scmp.ne.s32.totalorder %s115, %s116
      %p125 = scmp.eq.s32.totalorder %s37, 0
      %p126 = por %p124, %p125
      %p127 = scmp.ne.s32.totalorder %s115, %s116
      %p128 = scmp.eq.s32.totalorder %s38, 1
      %p129 = por %p127, %p128
      %p131 = scmp.ne.s32.totalorder %s116, %s130
      %p132 = scmp.eq.s32.totalorder %s38, 0
      %p133 = por %p131, %p132
      %s135 = sadd.s32 %s134, 1
      %p138 = scmp.eq.s32.totalorder %s32, 1
      %p139 = scmp.ne.s32.totalorder %s134, %s136
      %p140 = scmp.eq.s32.totalorder %s32, 0
      %p141 = por %p139, %p140
      %p142 = scmp.ne.s32.totalorder %s134, %s136
      %p143 = scmp.eq.s32.totalorder %s37, 1
      %p144 = por %p142, %p143
      %p145 = scmp.ne.s32.totalorder %s136, %s137
      %p146 = scmp.eq.s32.totalorder %s37, 0
      %p147 = por %p145, %p146
      %p148 = scmp.ne.s32.totalorder %s136, %s137
      %p149 = scmp.eq.s32.totalorder %s38, 1
      %p150 = por %p148, %p149
      %p152 = scmp.ne.s32.totalorder %s137, %s151
      %p153 = scmp.eq.s32.totalorder %s38, 0
      %p154 = por %p152, %p153
      %s156 = sadd.s32 %s155, 1
      %p159 = scmp.eq.s32.totalorder %s32, 1
      %p160 = scmp.ne.s32.totalorder %s155, %s157
      %p161 = scmp.eq.s32.totalorder %s32, 0
      %p162 = por %p160, %p161
      %p163 = scmp.ne.s32.totalorder %s155, %s157
      %p164 = scmp.eq.s32.totalorder %s37, 1
      %p165 = por %p163, %p164
      %p166 = scmp.ne.s32.totalorder %s157, %s158
      %p167 = scmp.eq.s32.totalorder %s37, 0
      %p168 = por %p166, %p167
      %p169 = scmp.ne.s32.totalorder %s157, %s158
      %p170 = scmp.eq.s32.totalorder %s38, 1
      %p171 = por %p169, %p170
      %p173 = scmp.ne.s32.totalorder %s158, %s172
      %p174 = scmp.eq.s32.totalorder %s38, 0
      %p175 = por %p173, %p174
      %s177 = sadd.s32 %s176, 1
      %p180 = scmp.eq.s32.totalorder %s32, 1
      %p181 = scmp.ne.s32.totalorder %s176, %s178
      %p182 = scmp.eq.s32.totalorder %s32, 0
      %p183 = por %p181, %p182
      %p184 = scmp.ne.s32.totalorder %s176, %s178
      %p185 = scmp.eq.s32.totalorder %s37, 1
      %p186 = por %p184, %p185
      %p187 = scmp.ne.s32.totalorder %s178, %s179
      %p188 = scmp.eq.s32.totalorder %s37, 0
      %p189 = por %p187, %p188
      %p190 = scmp.ne.s32.totalorder %s178, %s179
      %p191 = scmp.eq.s32.totalorder %s38, 1
      %p192 = por %p190, %p191
      %p194 = scmp.ne.s32.totalorder %s179, %s193
      %p195 = scmp.eq.s32.totalorder %s38, 0
      %p196 = por %p194, %p195
      %s198 = sadd.s32 %s197, 1
      %p201 = scmp.eq.s32.totalorder %s32, 1
      %p202 = scmp.ne.s32.totalorder %s197, %s199
      %p203 = scmp.eq.s32.totalorder %s32, 0
      %p204 = por %p202, %p203
      %p205 = scmp.ne.s32.totalorder %s197, %s199
      %p206 = scmp.eq.s32.totalorder %s37, 1
      %p207 = por %p205, %p206
      %p208 = scmp.ne.s32.totalorder %s199, %s200
      %p209 = scmp.eq.s32.totalorder %s37, 0
      %p210 = por %p208, %p209
      %p211 = scmp.ne.s32.totalorder %s199, %s200
      %p212 = scmp.eq.s32.totalorder %s38, 1
      %p213 = por %p211, %p212
      %p215 = scmp.ne.s32.totalorder %s200, %s214
      %p216 = scmp.eq.s32.totalorder %s38, 0
      %p217 = por %p215, %p216
      %s219 = sadd.s32 %s218, 1
      %p222 = scmp.eq.s32.totalorder %s32, 1
      %p223 = scmp.ne.s32.totalorder %s218, %s220
      %p224 = scmp.eq.s32.totalorder %s32, 0
      %p225 = por %p223, %p224
      %p226 = scmp.ne.s32.totalorder %s218, %s220
      %p227 = scmp.eq.s32.totalorder %s37, 1
      %p228 = por %p226, %p227
      %p229 = scmp.ne.s32.totalorder %s220, %s221
      %p230 = scmp.eq.s32.totalorder %s37, 0
      %p231 = por %p229, %p230
      %p232 = scmp.ne.s32.totalorder %s220, %s221
      %p233 = scmp.eq.s32.totalorder %s38, 1
      %p234 = por %p232, %p233
      %p236 = scmp.ne.s32.totalorder %s221, %s235
      %p237 = scmp.eq.s32.totalorder %s38, 0
      %p238 = por %p236, %p237
      %s240 = sadd.s32 %s239, 1
      %p243 = scmp.eq.s32.totalorder %s32, 1
      %p244 = scmp.ne.s32.totalorder %s239, %s241
      %p245 = scmp.eq.s32.totalorder %s32, 0
      %p246 = por %p244, %p245
      %p247 = scmp.ne.s32.totalorder %s239, %s241
      %p248 = scmp.eq.s32.totalorder %s37, 1
      %p249 = por %p247, %p248
      %p250 = scmp.ne.s32.totalorder %s241, %s242
      %p251 = scmp.eq.s32.totalorder %s37, 0
      %p252 = por %p250, %p251
      %p253 = scmp.ne.s32.totalorder %s241, %s242
      %p254 = scmp.eq.s32.totalorder %s38, 1
      %p255 = por %p253, %p254
      %p257 = scmp.ne.s32.totalorder %s242, %s256
      %p258 = scmp.eq.s32.totalorder %s38, 0
      %p259 = por %p257, %p258
      %s261 = sadd.s32 %s260, 1
      %p264 = scmp.eq.s32.totalorder %s32, 1
      %p265 = scmp.ne.s32.totalorder %s260, %s262
      %p266 = scmp.eq.s32.totalorder %s32, 0
      %p267 = por %p265, %p266
      %p268 = scmp.ne.s32.totalorder %s260, %s262
      %p269 = scmp.eq.s32.totalorder %s37, 1
      %p270 = por %p268, %p269
      %p271 = scmp.ne.s32.totalorder %s262, %s263
      %p272 = scmp.eq.s32.totalorder %s37, 0
      %p273 = por %p271, %p272
      %p274 = scmp.ne.s32.totalorder %s262, %s263
      %p275 = scmp.eq.s32.totalorder %s38, 1
      %p276 = por %p274, %p275
      %p278 = scmp.ne.s32.totalorder %s263, %s277
      %p279 = scmp.eq.s32.totalorder %s38, 0
      %p280 = por %p278, %p279
      %s281 = ssub.s32 %s39, %s58
      %s282 = ssub.s32 %s40, %s54
      %s283 = sor.u32 %s281, %s282
      %p284 = scmp.eq.s32.totalorder %s283, 0
      %s286 = sadd.s32 %s285, 1
      %s287 = scalar_select %p284, %s285, %s286
      %p290 = pneg %p284
      %p291 = scmp.eq.s32.totalorder %s32, 1
      %p292 = por %p290, %p291
      %p293 = scmp.ne.s32.totalorder %s285, %s288
      %p294 = scmp.eq.s32.totalorder %s32, 0
      %p295 = por %p293, %p294
      %p296 = scmp.ne.s32.totalorder %s285, %s288
      %p297 = scmp.eq.s32.totalorder %s37, 1
      %p298 = por %p296, %p297
      %p299 = scmp.ne.s32.totalorder %s288, %s289
      %p300 = scmp.eq.s32.totalorder %s37, 0
      %p301 = por %p299, %p300
      %p302 = scmp.ne.s32.totalorder %s288, %s289
      %p303 = scmp.eq.s32.totalorder %s38, 1
      %p304 = por %p302, %p303
      %p306 = scmp.ne.s32.totalorder %s289, %s305
      %p307 = scmp.eq.s32.totalorder %s38, 0
      %p308 = por %p306, %p307
      %s309 = ssub.s32 %s39, %s58
      %s310 = ssub.s32 %s40, %s54
      %s311 = sor.u32 %s309, %s310
      %p312 = scmp.eq.s32.totalorder %s311, 0
      %s314 = sadd.s32 %s313, 1
      %s315 = scalar_select %p312, %s313, %s314
      %p318 = pneg %p312
      %p319 = scmp.eq.s32.totalorder %s32, 1
      %p320 = por %p318, %p319
      %p321 = scmp.ne.s32.totalorder %s313, %s316
      %p322 = scmp.eq.s32.totalorder %s32, 0
      %p323 = por %p321, %p322
      %p324 = scmp.ne.s32.totalorder %s313, %s316
      %p325 = scmp.eq.s32.totalorder %s37, 1
      %p326 = por %p324, %p325
      %p327 = scmp.ne.s32.totalorder %s316, %s317
      %p328 = scmp.eq.s32.totalorder %s37, 0
      %p329 = por %p327, %p328
      %p330 = scmp.ne.s32.totalorder %s316, %s317
      %p331 = scmp.eq.s32.totalorder %s38, 1
      %p332 = por %p330, %p331
      %p334 = scmp.ne.s32.totalorder %s317, %s333
      %p335 = scmp.eq.s32.totalorder %s38, 0
      %p336 = por %p334, %p335
      %p337 = scmp.le.s32.totalorder 1, %s32
      %p338 = scmp.lt.s32.totalorder %s32, 3
      %p339 = pnand %p337, %p338
      %p340 = pneg %p339
      // Predicated region
      $region9: #{tpu_custom_call.1} parent=5 // pred_check
        _
      $region10: #{tpu_custom_call.1} parent=5 // pred_check_branch
        %342 = sbr.rel (%p339) target = $region12
      $region11: #{tpu_custom_call.1} parent=5 // pred_region
        %s343 = ssub.s32 %s32, 1
        // Predicated region
        $region13: #{tpu_custom_call.1} parent=11 // pred_check
          %p344 = pneg %p126
        $region14: #{tpu_custom_call.1} parent=11 // pred_check_branch
          %346 = sbr.rel (%p344) target = $region16
        $region15: #{tpu_custom_call.1} parent=11 // pred_region
          %s348 = ssub.s32 512, 512
          %349 = vsyncadd [#allocation8], %s348
          %s350 = sshll.u32 [#allocation9], 4
          %s351 = int_to_ptr.vmem [resolvable:$true] %s350
          %356 = dma.hbm_to_vmem [thread:$0]  %s2, 512, %s351, [#allocation8], 128, 128, 8
        $region16: #{tpu_custom_call.1} parent=11 // pred_fallthru
          _
        // Predicated region
        $region17: #{tpu_custom_call.1} parent=11 // pred_check
          %p357 = pneg %p147
        $region18: #{tpu_custom_call.1} parent=11 // pred_check_branch
          %359 = sbr.rel (%p357) target = $region20
        $region19: #{tpu_custom_call.1} parent=11 // pred_region
          %s361 = ssub.s32 512, 512
          %362 = vsyncadd [#allocation11], %s361
          %s363 = sshll.u32 [#allocation10], 4
          %s364 = int_to_ptr.vmem [resolvable:$true] %s363
          %369 = dma.hbm_to_vmem [thread:$0]  %s3, 512, %s364, [#allocation11], 128, 128, 8
        $region20: #{tpu_custom_call.1} parent=11 // pred_fallthru
          _
        // Predicated region
        $region21: #{tpu_custom_call.1} parent=11 // pred_check
          %p370 = pneg %p168
        $region22: #{tpu_custom_call.1} parent=11 // pred_check_branch
          %372 = sbr.rel (%p370) target = $region24
        $region23: #{tpu_custom_call.1} parent=11 // pred_region
          %s374 = ssub.s32 512, 512
          %375 = vsyncadd [#allocation11], %s374
          %s376 = sshll.u32 [#allocation12], 4
          %s377 = int_to_ptr.vmem [resolvable:$true] %s376
          %382 = dma.hbm_to_vmem [thread:$0]  %s4, 512, %s377, [#allocation11], 128, 128, 8
        $region24: #{tpu_custom_call.1} parent=11 // pred_fallthru
          _
        // Predicated region
        $region25: #{tpu_custom_call.1} parent=11 // pred_check
          %p383 = pneg %p189
        $region26: #{tpu_custom_call.1} parent=11 // pred_check_branch
          %385 = sbr.rel (%p383) target = $region28
        $region27: #{tpu_custom_call.1} parent=11 // pred_region
          %s387 = ssub.s32 512, 512
          %388 = vsyncadd [#allocation14], %s387
          %s389 = sshll.u32 [#allocation13], 4
          %s390 = int_to_ptr.vmem [resolvable:$true] %s389
          %395 = dma.hbm_to_vmem [thread:$0]  %s5, 512, %s390, [#allocation14], 128, 128, 8
        $region28: #{tpu_custom_call.1} parent=11 // pred_fallthru
          _
        // Predicated region
        $region29: #{tpu_custom_call.1} parent=11 // pred_check
          %p396 = pneg %p210
        $region30: #{tpu_custom_call.1} parent=11 // pred_check_branch
          %398 = sbr.rel (%p396) target = $region32
        $region31: #{tpu_custom_call.1} parent=11 // pred_region
          _
        $region32: #{tpu_custom_call.1} parent=11 // pred_fallthru
          _
        // Predicated region
        $region33: #{tpu_custom_call.1} parent=11 // pred_check
          %p399 = pneg %p231
        $region34: #{tpu_custom_call.1} parent=11 // pred_check_branch
          %401 = sbr.rel (%p399) target = $region36
        $region35: #{tpu_custom_call.1} parent=11 // pred_region
          _
        $region36: #{tpu_custom_call.1} parent=11 // pred_fallthru
          _
        // Predicated region
        $region37: #{tpu_custom_call.1} parent=11 // pred_check
          %p402 = pneg %p252
        $region38: #{tpu_custom_call.1} parent=11 // pred_check_branch
          %404 = sbr.rel (%p402) target = $region40
        $region39: #{tpu_custom_call.1} parent=11 // pred_region
          _
        $region40: #{tpu_custom_call.1} parent=11 // pred_fallthru
          _
        // Predicated region
        $region41: #{tpu_custom_call.1} parent=11 // pred_check
          %p405 = pneg %p273
        $region42: #{tpu_custom_call.1} parent=11 // pred_check_branch
          %407 = sbr.rel (%p405) target = $region44
        $region43: #{tpu_custom_call.1} parent=11 // pred_region
          _
        $region44: #{tpu_custom_call.1} parent=11 // pred_fallthru
          _
      $region12: #{tpu_custom_call.1} parent=5 // pred_fallthru
        _
      %p408 = scmp.lt.s32.totalorder %s32, 2
      // Predicated region
      $region45: #{tpu_custom_call.1} parent=5 // pred_check
        %p409 = pneg %p408
      $region46: #{tpu_custom_call.1} parent=5 // pred_check_branch
        %411 = sbr.rel (%p409) target = $region48
      $region47: #{tpu_custom_call.1} parent=5 // pred_region
        // Predicated region
        $region49: #{tpu_custom_call.1} parent=47 // pred_check
          %p412 = pneg %p73
        $region50: #{tpu_custom_call.1} parent=47 // pred_check_branch
          %414 = sbr.rel (%p412) target = $region52
        $region51: #{tpu_custom_call.1} parent=47 // pred_region
          %s415 = sand.u32 %s63, 1
          %s416 = scalar_lea.sflag [#allocation5], %s415
          %s417 = sand.u32 %s63, 1
          %s418 = smul.addr %s417, 8
          %s419 = scalar_lea.vmem [#allocation4], %s418
          %s421 = ssub.s32 128, 128
          %422 = vsyncadd %s416, %s421
          %s423 = sadd.s32 %s40, %s39
          %s424 = smul.addr %s423, 128
          %s425 = scalar_lea.hbm %s0, %s424
          %s427 = sshll.u32 %s419, 4
          %s428 = int_to_ptr.vmem [resolvable:$true] %s427
          %430 = dma.hbm_to_vmem [thread:$0]  %s425, 128, %s428, %s416
        $region52: #{tpu_custom_call.1} parent=47 // pred_fallthru
          _
        // Predicated region
        $region53: #{tpu_custom_call.1} parent=47 // pred_check
          %p431 = pneg %p99
        $region54: #{tpu_custom_call.1} parent=47 // pred_check_branch
          %433 = sbr.rel (%p431) target = $region56
        $region55: #{tpu_custom_call.1} parent=47 // pred_region
          %s434 = sand.u32 %s32, 1
          %s435 = scalar_lea.sflag [#allocation8], %s434
          %s436 = sand.u32 %s89, 1
          %s437 = smul.addr %s436, 16
          %s438 = scalar_lea.vmem [#allocation7], %s437
          %s440 = ssub.s32 256, 256
          %441 = vsyncadd %s435, %s440
          %s442 = smul.addr %s39, 2
          %s443 = smul.addr %s442, 128
          %s444 = scalar_lea.hbm %s1, %s443
          %s445 = sshll.u32 %s438, 4
          %s446 = int_to_ptr.vmem [resolvable:$true] %s445
          %451 = dma.hbm_to_vmem [thread:$0]  %s444, 256, %s446, %s435, 128, 128, 8
        $region56: #{tpu_custom_call.1} parent=47 // pred_fallthru
          _
      $region48: #{tpu_custom_call.1} parent=5 // pred_fallthru
        _
      %p452 = scmp.le.s32.totalorder 1, %s32
      %p453 = scmp.lt.s32.totalorder %s32, 3
      %p454 = pnand %p452, %p453
      %p455 = pneg %p454
      // Predicated region
      $region57: #{tpu_custom_call.1} parent=5 // pred_check
        _
      $region58: #{tpu_custom_call.1} parent=5 // pred_check_branch
        %457 = sbr.rel (%p454) target = $region60
      $region59: #{tpu_custom_call.1} parent=5 // pred_region
        %s458 = ssub.s32 %s32, 1
        %s459 = sand.u32 %s66, 1
        %s460 = scalar_lea.sflag [#allocation5], %s459
        %s461 = sand.u32 %s66, 1
        %s462 = smul.addr %s461, 8
        %s463 = scalar_lea.vmem [#allocation4], %s462
        // Predicated region
        $region61: #{tpu_custom_call.1} parent=59 // pred_check
          %p464 = pneg %p79
        $region62: #{tpu_custom_call.1} parent=59 // pred_check_branch
          %466 = sbr.rel (%p464) target = $region64
        $region63: #{tpu_custom_call.1} parent=59 // pred_region
          %467 = dma.done %s460, 128
        $region64: #{tpu_custom_call.1} parent=59 // pred_fallthru
          _
        %s468 = sand.u32 %s37, 1
        %s469 = scalar_lea.sflag [#allocation8], %s468
        %s470 = sand.u32 %s92, 1
        %s471 = smul.addr %s470, 16
        %s472 = scalar_lea.vmem [#allocation7], %s471
        // Predicated region
        $region65: #{tpu_custom_call.1} parent=59 // pred_check
          %p473 = pneg %p105
        $region66: #{tpu_custom_call.1} parent=59 // pred_check_branch
          %475 = sbr.rel (%p473) target = $region68
        $region67: #{tpu_custom_call.1} parent=59 // pred_region
          %476 = dma.done %s469, 256
        $region68: #{tpu_custom_call.1} parent=59 // pred_fallthru
          _
        // Predicated region
        $region69: #{tpu_custom_call.1} parent=59 // pred_check
          %p477 = pneg %p126
        $region70: #{tpu_custom_call.1} parent=59 // pred_check_branch
          %479 = sbr.rel (%p477) target = $region72
        $region71: #{tpu_custom_call.1} parent=59 // pred_region
          %480 = dma.done [#allocation8], 512
        $region72: #{tpu_custom_call.1} parent=59 // pred_fallthru
          _
        // Predicated region
        $region73: #{tpu_custom_call.1} parent=59 // pred_check
          %p481 = pneg %p147
        $region74: #{tpu_custom_call.1} parent=59 // pred_check_branch
          %483 = sbr.rel (%p481) target = $region76
        $region75: #{tpu_custom_call.1} parent=59 // pred_region
          %484 = dma.done [#allocation11], 512
        $region76: #{tpu_custom_call.1} parent=59 // pred_fallthru
          _
        // Predicated region
        $region77: #{tpu_custom_call.1} parent=59 // pred_check
          %p485 = pneg %p168
        $region78: #{tpu_custom_call.1} parent=59 // pred_check_branch
          %487 = sbr.rel (%p485) target = $region80
        $region79: #{tpu_custom_call.1} parent=59 // pred_region
          %488 = dma.done [#allocation11], 512
        $region80: #{tpu_custom_call.1} parent=59 // pred_fallthru
          _
        // Predicated region
        $region81: #{tpu_custom_call.1} parent=59 // pred_check
          %p489 = pneg %p189
        $region82: #{tpu_custom_call.1} parent=59 // pred_check_branch
          %491 = sbr.rel (%p489) target = $region84
        $region83: #{tpu_custom_call.1} parent=59 // pred_region
          %492 = dma.done [#allocation14], 512
        $region84: #{tpu_custom_call.1} parent=59 // pred_fallthru
          _
        %s493 = sand.u32 %s66, 1
        %s494 = scalar_lea.sflag [#allocation5], %s493
        %s495 = sand.u32 %s66, 1
        %s496 = smul.addr %s495, 8
        %s497 = scalar_lea.vmem [#allocation4], %s496
        %p498 = pneg %p79
        %p499 = pneg %p76
        %s500 = sand.u32 %s37, 1
        %s501 = scalar_lea.sflag [#allocation8], %s500
        %s502 = sand.u32 %s92, 1
        %s503 = smul.addr %s502, 16
        %s504 = scalar_lea.vmem [#allocation7], %s503
        %p505 = pneg %p105
        %p506 = pneg %p102
        %p507 = pneg %p126
        %p508 = pneg %p123
        %p509 = pneg %p147
        %p510 = pneg %p144
        %p511 = pneg %p168
        %p512 = pneg %p165
        %p513 = pneg %p189
        %p514 = pneg %p186
        %p515 = pneg %p210
        %p516 = pneg %p207
        %p517 = pneg %p231
        %p518 = pneg %p228
        %p519 = pneg %p252
        %p520 = pneg %p249
        %p521 = pneg %p273
        %p522 = pneg %p270
        %p523 = pneg %p301
        %p524 = pneg %p298
        %s525 = sand.u32 %s288, 1
        %s526 = scalar_lea.sflag [#allocation6], %s525
        %s527 = sand.u32 %s288, 1
        %s528 = smul.addr %s527, 8
        %s529 = scalar_lea.vmem [#allocation15], %s528
        %p530 = pneg %p329
        %p531 = pneg %p326
        %s532 = sand.u32 %s316, 1
        %s533 = scalar_lea.sflag [#allocation17], %s532
        %s534 = sand.u32 %s316, 1
        %s535 = smul.addr %s534, 8
        %s536 = scalar_lea.vmem [#allocation16], %s535
        %v537 = vld [vmem:[%s463] sm:$0xff]
        %v538 = vld [vmem:[%s472] sm:$0xff]
        %v539 = vld [vmem:[%s472 + $0x8] sm:$0xff]
        %s540 = smul.u32 %s44, 32
        %s541 = scalar_lea.vmem [#allocation9], %s540
        %v542 = vld [vmem:[%s541] sm:$0xff]
        %v543 = vld [vmem:[%s541 + $0x8] sm:$0xff]
        %v544 = vld [vmem:[%s541 + $0x10] sm:$0xff]
        %v545 = vld [vmem:[%s541 + $0x18] sm:$0xff]
        %s546 = scalar_lea.vmem [#allocation10], %s540
        %v547 = vld [vmem:[%s546] sm:$0xff]
        %v548 = vld [vmem:[%s546 + $0x8] sm:$0xff]
        %v549 = vld [vmem:[%s546 + $0x10] sm:$0xff]
        %v550 = vld [vmem:[%s546 + $0x18] sm:$0xff]
        %s551 = scalar_lea.vmem [#allocation12], %s540
        %v552 = vld [vmem:[%s551] sm:$0xff]
        %v553 = vld [vmem:[%s551 + $0x8] sm:$0xff]
        %v554 = vld [vmem:[%s551 + $0x10] sm:$0xff]
        %v555 = vld [vmem:[%s551 + $0x18] sm:$0xff]
        %s556 = scalar_lea.vmem [#allocation13], %s540
        %v557 = vld [vmem:[%s556] sm:$0xff]
        %v558 = vld [vmem:[%s556 + $0x8] sm:$0xff]
        %v559 = vld [vmem:[%s556 + $0x10] sm:$0xff]
        %v560 = vld [vmem:[%s556 + $0x18] sm:$0xff]
        %s561 = scalar_lea.vmem %s6, %s44
        %v562 = vld [vmem:[%s561] sm:$0x1]
        %v564 = vlaneseq
        %v565 = vshrl.u32 %v564, 7
        %v566 = vsub.s32 0, %v565
        %v567 = vrot.slane %v562, %v566
        %vm569 = vcmask 261120
        %v571 = vsel %vm569, %v537, 0
        %573 = vmatprep.subr.mxu0 0.0
        %574 = vmatpush1.msra.mxu0 %v542
        %575 = vmatprep.subr.mxu0 0.0
        %576 = vmatpush1.msra.mxu0 %v543
        %577 = vmatprep.subr.mxu0 0.0
        %578 = vmatpush1.msra.mxu0 %v544
        %579 = vmatprep.subr.mxu0 0.0
        %580 = vmatpush1.msra.mxu0 %v545
        %581 = vmatprep.subr.mxu0 0.0
        %582 = vmatpush1.msra.mxu0 0.0
        %583 = vmatprep.subr.mxu0 0.0
        %584 = vmatpush1.msra.mxu0 0.0
        %585 = vmatprep.subr.mxu0 0.0
        %586 = vmatpush1.msra.mxu0 0.0
        %587 = vmatprep.subr.mxu0 0.0
        %588 = vmatpush1.msra.mxu0 0.0
        %589 = vmatprep.subr.mxu0 0.0
        %590 = vmatpush1.msra.mxu0 0.0
        %591 = vmatprep.subr.mxu0 0.0
        %592 = vmatpush1.msra.mxu0 0.0
        %593 = vmatprep.subr.mxu0 0.0
        %594 = vmatpush1.msra.mxu0 0.0
        %595 = vmatprep.subr.mxu0 0.0
        %596 = vmatpush1.msra.mxu0 0.0
        %597 = vmatprep.subr.mxu0 0.0
        %598 = vmatpush1.msra.mxu0 0.0
        %599 = vmatprep.subr.mxu0 0.0
        %600 = vmatpush1.msra.mxu0 0.0
        %601 = vmatprep.subr.mxu0 0.0
        %602 = vmatpush1.msra.mxu0 0.0
        %603 = vmatprep.subr.mxu0 0.0
        %604 = vmatpush1.msra.mxu0 0.0
        %605 = vmatprep.subr.mxu0 0.0
        %606 = vmatpush1.msra.mxu0 0.0
        %607 = vmatprep.subr.mxu0 0.0
        %608 = vmatpush1.msra.mxu0 0.0
        %609 = vmatprep.subr.mxu0 0.0
        %610 = vmatpush1.msra.mxu0 0.0
        %611 = vmatprep.subr.mxu0 0.0
        %612 = vmatpush1.msra.mxu0 0.0
        %613 = vmatprep.subr.mxu0 0.0
        %614 = vmatpush1.msra.mxu0 0.0
        %615 = vmatprep.subr.mxu0 0.0
        %616 = vmatpush1.msra.mxu0 0.0
        %617 = vmatprep.subr.mxu0 0.0
        %618 = vmatpush1.msra.mxu0 0.0
        %619 = vmatprep.subr.mxu0 0.0
        %620 = vmatpush1.msra.mxu0 0.0
        %621 = vmatprep.subr.mxu0 0.0
        %622 = vmatpush1.msra.mxu0 0.0
        %623 = vmatprep.subr.mxu0 0.0
        %624 = vmatpush1.msra.mxu0 0.0
        %625 = vmatprep.subr.mxu0 0.0
        %626 = vmatpush1.msra.mxu0 0.0
        %627 = vmatprep.subr.mxu0 0.0
        %628 = vmatpush1.msra.mxu0 0.0
        %629 = vmatprep.subr.mxu0 0.0
        %630 = vmatpush1.msra.mxu0 0.0
        %631 = vmatprep.subr.mxu0 0.0
        %632 = vmatpush1.msra.mxu0 0.0
        %633 = vmatprep.subr.mxu0 0.0
        %634 = vmatpush1.msra.mxu0 0.0
        %635 = vmatprep.subr.mxu0 0.0
        %636 = vmatpush1.msra.mxu0 0.0
        %637 = vmatprep.mubr.f32.mxu0 0.0
        %638 = vmatmul.mubr.f32.gmra.mrb[0].mxu0 %v571
        %v639 = vpop.f32.mrb[0].mxu0
        %v640 = vadd.f32 %v567, %v639
        %v641 = vpop.f32.mrb[0].mxu0
        %642 = vdwg.mxu0
        %s643 = scalar_lea.vmem %s7, %s44
        %v644 = vld [vmem:[%s643] sm:$0x1]
        %v646 = vlaneseq
        %v647 = vshrl.u32 %v646, 7
        %v648 = vsub.s32 0, %v647
        %v649 = vrot.slane %v644, %v648
        %v652 = vsel %vm569, %v538, 0
        %v655 = vsel %vm569, %v539, 0
        %657 = vmatprep.subr.mxu0 0.0
        %658 = vmatpush1.msra.mxu0 %v547
        %659 = vmatprep.subr.mxu0 0.0
        %660 = vmatpush1.msra.mxu0 %v548
        %661 = vmatprep.subr.mxu0 0.0
        %662 = vmatpush1.msra.mxu0 %v549
        %663 = vmatprep.subr.mxu0 0.0
        %664 = vmatpush1.msra.mxu0 %v550
        %665 = vmatprep.subr.mxu0 0.0
        %666 = vmatpush1.msra.mxu0 0.0
        %667 = vmatprep.subr.mxu0 0.0
        %668 = vmatpush1.msra.mxu0 0.0
        %669 = vmatprep.subr.mxu0 0.0
        %670 = vmatpush1.msra.mxu0 0.0
        %671 = vmatprep.subr.mxu0 0.0
        %672 = vmatpush1.msra.mxu0 0.0
        %673 = vmatprep.subr.mxu0 0.0
        %674 = vmatpush1.msra.mxu0 0.0
        %675 = vmatprep.subr.mxu0 0.0
        %676 = vmatpush1.msra.mxu0 0.0
        %677 = vmatprep.subr.mxu0 0.0
        %678 = vmatpush1.msra.mxu0 0.0
        %679 = vmatprep.subr.mxu0 0.0
        %680 = vmatpush1.msra.mxu0 0.0
        %681 = vmatprep.subr.mxu0 0.0
        %682 = vmatpush1.msra.mxu0 0.0
        %683 = vmatprep.subr.mxu0 0.0
        %684 = vmatpush1.msra.mxu0 0.0
        %685 = vmatprep.subr.mxu0 0.0
        %686 = vmatpush1.msra.mxu0 0.0
        %687 = vmatprep.subr.mxu0 0.0
        %688 = vmatpush1.msra.mxu0 0.0
        %689 = vmatprep.subr.mxu0 0.0
        %690 = vmatpush1.msra.mxu0 0.0
        %691 = vmatprep.subr.mxu0 0.0
        %692 = vmatpush1.msra.mxu0 0.0
        %693 = vmatprep.subr.mxu0 0.0
        %694 = vmatpush1.msra.mxu0 0.0
        %695 = vmatprep.subr.mxu0 0.0
        %696 = vmatpush1.msra.mxu0 0.0
        %697 = vmatprep.subr.mxu0 0.0
        %698 = vmatpush1.msra.mxu0 0.0
        %699 = vmatprep.subr.mxu0 0.0
        %700 = vmatpush1.msra.mxu0 0.0
        %701 = vmatprep.subr.mxu0 0.0
        %702 = vmatpush1.msra.mxu0 0.0
        %703 = vmatprep.subr.mxu0 0.0
        %704 = vmatpush1.msra.mxu0 0.0
        %705 = vmatprep.subr.mxu0 0.0
        %706 = vmatpush1.msra.mxu0 0.0
        %707 = vmatprep.subr.mxu0 0.0
        %708 = vmatpush1.msra.mxu0 0.0
        %709 = vmatprep.subr.mxu0 0.0
        %710 = vmatpush1.msra.mxu0 0.0
        %711 = vmatprep.subr.mxu0 0.0
        %712 = vmatpush1.msra.mxu0 0.0
        %713 = vmatprep.subr.mxu0 0.0
        %714 = vmatpush1.msra.mxu0 0.0
        %715 = vmatprep.subr.mxu0 0.0
        %716 = vmatpush1.msra.mxu0 0.0
        %717 = vmatprep.subr.mxu0 0.0
        %718 = vmatpush1.msra.mxu0 0.0
        %719 = vmatprep.subr.mxu0 0.0
        %720 = vmatpush1.msra.mxu0 0.0
        %721 = vmatprep.mubr.f32.mxu0 0.0
        %722 = vmatmul.mubr.f32.gmra.mrb[0].mxu0 %v652
        %v723 = vpop.f32.mrb[0].mxu0
        %v724 = vadd.f32 %v649, %v723
        %v725 = vpop.f32.mrb[0].mxu0
        %726 = vmatprep.mubr.f32.mxu0 0.0
        %727 = vmatmul.mubr.f32.gmra.mrb[0].mxu0 %v655
        %v728 = vpop.f32.mrb[0].mxu0
        %v729 = vadd.f32 %v649, %v728
        %v730 = vpop.f32.mrb[0].mxu0
        %731 = vdwg.mxu0
        %s732 = scalar_lea.vmem %s8, %s44
        %v733 = vld [vmem:[%s732] sm:$0x1]
        %v735 = vlaneseq
        %v736 = vshrl.u32 %v735, 7
        %v737 = vsub.s32 0, %v736
        %v738 = vrot.slane %v733, %v737
        %740 = vmatprep.subr.mxu0 0.0
        %741 = vmatpush1.msra.mxu0 %v552
        %742 = vmatprep.subr.mxu0 0.0
        %743 = vmatpush1.msra.mxu0 %v553
        %744 = vmatprep.subr.mxu0 0.0
        %745 = vmatpush1.msra.mxu0 %v554
        %746 = vmatprep.subr.mxu0 0.0
        %747 = vmatpush1.msra.mxu0 %v555
        %748 = vmatprep.subr.mxu0 0.0
        %749 = vmatpush1.msra.mxu0 0.0
        %750 = vmatprep.subr.mxu0 0.0
        %751 = vmatpush1.msra.mxu0 0.0
        %752 = vmatprep.subr.mxu0 0.0
        %753 = vmatpush1.msra.mxu0 0.0
        %754 = vmatprep.subr.mxu0 0.0
        %755 = vmatpush1.msra.mxu0 0.0
        %756 = vmatprep.subr.mxu0 0.0
        %757 = vmatpush1.msra.mxu0 0.0
        %758 = vmatprep.subr.mxu0 0.0
        %759 = vmatpush1.msra.mxu0 0.0
        %760 = vmatprep.subr.mxu0 0.0
        %761 = vmatpush1.msra.mxu0 0.0
        %762 = vmatprep.subr.mxu0 0.0
        %763 = vmatpush1.msra.mxu0 0.0
        %764 = vmatprep.subr.mxu0 0.0
        %765 = vmatpush1.msra.mxu0 0.0
        %766 = vmatprep.subr.mxu0 0.0
        %767 = vmatpush1.msra.mxu0 0.0
        %768 = vmatprep.subr.mxu0 0.0
        %769 = vmatpush1.msra.mxu0 0.0
        %770 = vmatprep.subr.mxu0 0.0
        %771 = vmatpush1.msra.mxu0 0.0
        %772 = vmatprep.subr.mxu0 0.0
        %773 = vmatpush1.msra.mxu0 0.0
        %774 = vmatprep.subr.mxu0 0.0
        %775 = vmatpush1.msra.mxu0 0.0
        %776 = vmatprep.subr.mxu0 0.0
        %777 = vmatpush1.msra.mxu0 0.0
        %778 = vmatprep.subr.mxu0 0.0
        %779 = vmatpush1.msra.mxu0 0.0
        %780 = vmatprep.subr.mxu0 0.0
        %781 = vmatpush1.msra.mxu0 0.0
        %782 = vmatprep.subr.mxu0 0.0
        %783 = vmatpush1.msra.mxu0 0.0
        %784 = vmatprep.subr.mxu0 0.0
        %785 = vmatpush1.msra.mxu0 0.0
        %786 = vmatprep.subr.mxu0 0.0
        %787 = vmatpush1.msra.mxu0 0.0
        %788 = vmatprep.subr.mxu0 0.0
        %789 = vmatpush1.msra.mxu0 0.0
        %790 = vmatprep.subr.mxu0 0.0
        %791 = vmatpush1.msra.mxu0 0.0
        %792 = vmatprep.subr.mxu0 0.0
        %793 = vmatpush1.msra.mxu0 0.0
        %794 = vmatprep.subr.mxu0 0.0
        %795 = vmatpush1.msra.mxu0 0.0
        %796 = vmatprep.subr.mxu0 0.0
        %797 = vmatpush1.msra.mxu0 0.0
        %798 = vmatprep.subr.mxu0 0.0
        %799 = vmatpush1.msra.mxu0 0.0
        %800 = vmatprep.subr.mxu0 0.0
        %801 = vmatpush1.msra.mxu0 0.0
        %802 = vmatprep.subr.mxu0 0.0
        %803 = vmatpush1.msra.mxu0 0.0
        %804 = vmatprep.mubr.f32.mxu0 0.0
        %805 = vmatmul.mubr.f32.gmra.mrb[0].mxu0 %v652
        %v806 = vpop.f32.mrb[0].mxu0
        %v807 = vadd.f32 %v738, %v806
        %v808 = vpop.f32.mrb[0].mxu0
        %809 = vmatprep.mubr.f32.mxu0 0.0
        %810 = vmatmul.mubr.f32.gmra.mrb[0].mxu0 %v655
        %v811 = vpop.f32.mrb[0].mxu0
        %v812 = vadd.f32 %v738, %v811
        %v813 = vpop.f32.mrb[0].mxu0
        %814 = vdwg.mxu0
        %vm815 = vcmask 64512
        %v817 = vsel %vm815, %v640, 0
        %v820 = vsel %vm815, %v724, 0
        %v823 = vsel %vm815, %v729, 0
        %825 = vmatprep.subr.mxu0 0.0
        %826 = vmatpush1.xpose.msra.mxu0 %v820
        %827 = vmatprep.subr.mxu0 0.0
        %828 = vmatpush1.xpose.msra.mxu0 %v823
        %829 = vmatprep.subr.mxu0 0.0
        %830 = vmatpush1.xpose.msra.mxu0 0.0
        %831 = vmatprep.subr.mxu0 0.0
        %832 = vmatpush1.xpose.msra.mxu0 0.0
        %833 = vmatprep.subr.mxu0 0.0
        %834 = vmatpush1.xpose.msra.mxu0 0.0
        %835 = vmatprep.subr.mxu0 0.0
        %836 = vmatpush1.xpose.msra.mxu0 0.0
        %837 = vmatprep.subr.mxu0 0.0
        %838 = vmatpush1.xpose.msra.mxu0 0.0
        %839 = vmatprep.subr.mxu0 0.0
        %840 = vmatpush1.xpose.msra.mxu0 0.0
        %841 = vmatprep.subr.mxu0 0.0
        %842 = vmatpush1.xpose.msra.mxu0 0.0
        %843 = vmatprep.subr.mxu0 0.0
        %844 = vmatpush1.xpose.msra.mxu0 0.0
        %845 = vmatprep.subr.mxu0 0.0
        %846 = vmatpush1.xpose.msra.mxu0 0.0
        %847 = vmatprep.subr.mxu0 0.0
        %848 = vmatpush1.xpose.msra.mxu0 0.0
        %849 = vmatprep.subr.mxu0 0.0
        %850 = vmatpush1.xpose.msra.mxu0 0.0
        %851 = vmatprep.subr.mxu0 0.0
        %852 = vmatpush1.xpose.msra.mxu0 0.0
        %853 = vmatprep.subr.mxu0 0.0
        %854 = vmatpush1.xpose.msra.mxu0 0.0
        %855 = vmatprep.subr.mxu0 0.0
        %856 = vmatpush1.xpose.msra.mxu0 0.0
        %857 = vmatprep.subr.mxu0 0.0
        %858 = vmatpush1.xpose.msra.mxu0 0.0
        %859 = vmatprep.subr.mxu0 0.0
        %860 = vmatpush1.xpose.msra.mxu0 0.0
        %861 = vmatprep.subr.mxu0 0.0
        %862 = vmatpush1.xpose.msra.mxu0 0.0
        %863 = vmatprep.subr.mxu0 0.0
        %864 = vmatpush1.xpose.msra.mxu0 0.0
        %865 = vmatprep.subr.mxu0 0.0
        %866 = vmatpush1.xpose.msra.mxu0 0.0
        %867 = vmatprep.subr.mxu0 0.0
        %868 = vmatpush1.xpose.msra.mxu0 0.0
        %869 = vmatprep.subr.mxu0 0.0
        %870 = vmatpush1.xpose.msra.mxu0 0.0
        %871 = vmatprep.subr.mxu0 0.0
        %872 = vmatpush1.xpose.msra.mxu0 0.0
        %873 = vmatprep.subr.mxu0 0.0
        %874 = vmatpush1.xpose.msra.mxu0 0.0
        %875 = vmatprep.subr.mxu0 0.0
        %876 = vmatpush1.xpose.msra.mxu0 0.0
        %877 = vmatprep.subr.mxu0 0.0
        %878 = vmatpush1.xpose.msra.mxu0 0.0
        %879 = vmatprep.subr.mxu0 0.0
        %880 = vmatpush1.xpose.msra.mxu0 0.0
        %881 = vmatprep.subr.mxu0 0.0
        %882 = vmatpush1.xpose.msra.mxu0 0.0
        %883 = vmatprep.subr.mxu0 0.0
        %884 = vmatpush1.xpose.msra.mxu0 0.0
        %885 = vmatprep.subr.mxu0 0.0
        %886 = vmatpush1.xpose.msra.mxu0 0.0
        %887 = vmatprep.subr.mxu0 0.0
        %888 = vmatpush1.xpose.msra.mxu0 0.0
        %889 = vmatprep.mubr.f32.mxu0 0.0
        %890 = vmatmul.mubr.f32.gmra.mrb[0].mxu0 %v817
        %v891 = vpop.f32.mrb[0].mxu0
        %v892 = vadd.f32 0.0, %v891
        %v893 = vpop.f32.mrb[0].mxu0
        %894 = vdwg.mxu0
        %vm895 = vcmask 130048
        %v896 = vsel %vm895, %v892, -inf
        %897 = vmax.xlane.f32.xlu0 %v896
        %v898 = vpop.xlane.xlu0 %897
        %v899 = vsub.f32 %v892, %v898
        %v900 = vmul.f32 %v899, 1.442695
        %v901 = vpow.pop %v900
        %v902 = vsel %vm895, %v901, 0.0
        %903 = vadd.xlane.f32.xlu0 %v902
        %v904 = vpop.xlane.xlu0 %903
        %v905 = vrcp.pop %v904
        %v906 = vmul.f32 %v901, %v905
        %v908 = vsel %vm895, %v906, 0
        %910 = vmatprep.subr.mxu0 0.0
        %911 = vmatpush1.msra.mxu0 %v807
        %912 = vmatprep.subr.mxu0 0.0
        %913 = vmatpush1.msra.mxu0 %v812
        %914 = vmatprep.subr.mxu0 0.0
        %915 = vmatpush1.msra.mxu0 0.0
        %916 = vmatprep.subr.mxu0 0.0
        %917 = vmatpush1.msra.mxu0 0.0
        %918 = vmatprep.subr.mxu0 0.0
        %919 = vmatpush1.msra.mxu0 0.0
        %920 = vmatprep.subr.mxu0 0.0
        %921 = vmatpush1.msra.mxu0 0.0
        %922 = vmatprep.subr.mxu0 0.0
        %923 = vmatpush1.msra.mxu0 0.0
        %924 = vmatprep.subr.mxu0 0.0
        %925 = vmatpush1.msra.mxu0 0.0
        %926 = vmatprep.subr.mxu0 0.0
        %927 = vmatpush1.msra.mxu0 0.0
        %928 = vmatprep.subr.mxu0 0.0
        %929 = vmatpush1.msra.mxu0 0.0
        %930 = vmatprep.subr.mxu0 0.0
        %931 = vmatpush1.msra.mxu0 0.0
        %932 = vmatprep.subr.mxu0 0.0
        %933 = vmatpush1.msra.mxu0 0.0
        %934 = vmatprep.subr.mxu0 0.0
        %935 = vmatpush1.msra.mxu0 0.0
        %936 = vmatprep.subr.mxu0 0.0
        %937 = vmatpush1.msra.mxu0 0.0
        %938 = vmatprep.subr.mxu0 0.0
        %939 = vmatpush1.msra.mxu0 0.0
        %940 = vmatprep.subr.mxu0 0.0
        %941 = vmatpush1.msra.mxu0 0.0
        %942 = vmatprep.subr.mxu0 0.0
        %943 = vmatpush1.msra.mxu0 0.0
        %944 = vmatprep.subr.mxu0 0.0
        %945 = vmatpush1.msra.mxu0 0.0
        %946 = vmatprep.subr.mxu0 0.0
        %947 = vmatpush1.msra.mxu0 0.0
        %948 = vmatprep.subr.mxu0 0.0
        %949 = vmatpush1.msra.mxu0 0.0
        %950 = vmatprep.subr.mxu0 0.0
        %951 = vmatpush1.msra.mxu0 0.0
        %952 = vmatprep.subr.mxu0 0.0
        %953 = vmatpush1.msra.mxu0 0.0
        %954 = vmatprep.subr.mxu0 0.0
        %955 = vmatpush1.msra.mxu0 0.0
        %956 = vmatprep.subr.mxu0 0.0
        %957 = vmatpush1.msra.mxu0 0.0
        %958 = vmatprep.subr.mxu0 0.0
        %959 = vmatpush1.msra.mxu0 0.0
        %960 = vmatprep.subr.mxu0 0.0
        %961 = vmatpush1.msra.mxu0 0.0
        %962 = vmatprep.subr.mxu0 0.0
        %963 = vmatpush1.msra.mxu0 0.0
        %964 = vmatprep.subr.mxu0 0.0
        %965 = vmatpush1.msra.mxu0 0.0
        %966 = vmatprep.subr.mxu0 0.0
        %967 = vmatpush1.msra.mxu0 0.0
        %968 = vmatprep.subr.mxu0 0.0
        %969 = vmatpush1.msra.mxu0 0.0
        %970 = vmatprep.subr.mxu0 0.0
        %971 = vmatpush1.msra.mxu0 0.0
        %972 = vmatprep.subr.mxu0 0.0
        %973 = vmatpush1.msra.mxu0 0.0
        %974 = vmatprep.mubr.f32.mxu0 0.0
        %975 = vmatmul.mubr.f32.gmra.mrb[0].mxu0 %v908
        %v976 = vpop.f32.mrb[0].mxu0
        %v977 = vadd.f32 0.0, %v976
        %v978 = vpop.f32.mrb[0].mxu0
        %979 = vdwg.mxu0
        %980 = vrot.lane.b32.xlu0 %v640, 120
        %v981 = vpop.permute.xlu0 %980
        %982 = vrot.lane.b32.xlu0 %v724, 120
        %v983 = vpop.permute.xlu0 %982
        %984 = vrot.lane.b32.xlu0 %v729, 120
        %v985 = vpop.permute.xlu0 %984
        %v986 = vsel %vm815, %v981, 0
        %v988 = vsel %vm815, %v983, 0
        %v990 = vsel %vm815, %v985, 0
        %992 = vmatprep.subr.mxu0 0.0
        %993 = vmatpush1.xpose.msra.mxu0 %v988
        %994 = vmatprep.subr.mxu0 0.0
        %995 = vmatpush1.xpose.msra.mxu0 %v990
        %996 = vmatprep.subr.mxu0 0.0
        %997 = vmatpush1.xpose.msra.mxu0 0.0
        %998 = vmatprep.subr.mxu0 0.0
        %999 = vmatpush1.xpose.msra.mxu0 0.0
        %1000 = vmatprep.subr.mxu0 0.0
        %1001 = vmatpush1.xpose.msra.mxu0 0.0
        %1002 = vmatprep.subr.mxu0 0.0
        %1003 = vmatpush1.xpose.msra.mxu0 0.0
        %1004 = vmatprep.subr.mxu0 0.0
        %1005 = vmatpush1.xpose.msra.mxu0 0.0
        %1006 = vmatprep.subr.mxu0 0.0
        %1007 = vmatpush1.xpose.msra.mxu0 0.0
        %1008 = vmatprep.subr.mxu0 0.0
        %1009 = vmatpush1.xpose.msra.mxu0 0.0
        %1010 = vmatprep.subr.mxu0 0.0
        %1011 = vmatpush1.xpose.msra.mxu0 0.0
        %1012 = vmatprep.subr.mxu0 0.0
        %1013 = vmatpush1.xpose.msra.mxu0 0.0
        %1014 = vmatprep.subr.mxu0 0.0
        %1015 = vmatpush1.xpose.msra.mxu0 0.0
        %1016 = vmatprep.subr.mxu0 0.0
        %1017 = vmatpush1.xpose.msra.mxu0 0.0
        %1018 = vmatprep.subr.mxu0 0.0
        %1019 = vmatpush1.xpose.msra.mxu0 0.0
        %1020 = vmatprep.subr.mxu0 0.0
        %1021 = vmatpush1.xpose.msra.mxu0 0.0
        %1022 = vmatprep.subr.mxu0 0.0
        %1023 = vmatpush1.xpose.msra.mxu0 0.0
        %1024 = vmatprep.subr.mxu0 0.0
        %1025 = vmatpush1.xpose.msra.mxu0 0.0
        %1026 = vmatprep.subr.mxu0 0.0
        %1027 = vmatpush1.xpose.msra.mxu0 0.0
        %1028 = vmatprep.subr.mxu0 0.0
        %1029 = vmatpush1.xpose.msra.mxu0 0.0
        %1030 = vmatprep.subr.mxu0 0.0
        %1031 = vmatpush1.xpose.msra.mxu0 0.0
        %1032 = vmatprep.subr.mxu0 0.0
        %1033 = vmatpush1.xpose.msra.mxu0 0.0
        %1034 = vmatprep.subr.mxu0 0.0
        %1035 = vmatpush1.xpose.msra.mxu0 0.0
        %1036 = vmatprep.subr.mxu0 0.0
        %1037 = vmatpush1.xpose.msra.mxu0 0.0
        %1038 = vmatprep.subr.mxu0 0.0
        %1039 = vmatpush1.xpose.msra.mxu0 0.0
        %1040 = vmatprep.subr.mxu0 0.0
        %1041 = vmatpush1.xpose.msra.mxu0 0.0
        %1042 = vmatprep.subr.mxu0 0.0
        %1043 = vmatpush1.xpose.msra.mxu0 0.0
        %1044 = vmatprep.subr.mxu0 0.0
        %1045 = vmatpush1.xpose.msra.mxu0 0.0
        %1046 = vmatprep.subr.mxu0 0.0
        %1047 = vmatpush1.xpose.msra.mxu0 0.0
        %1048 = vmatprep.subr.mxu0 0.0
        %1049 = vmatpush1.xpose.msra.mxu0 0.0
        %1050 = vmatprep.subr.mxu0 0.0
        %1051 = vmatpush1.xpose.msra.mxu0 0.0
        %1052 = vmatprep.subr.mxu0 0.0
        %1053 = vmatpush1.xpose.msra.mxu0 0.0
        %1054 = vmatprep.subr.mxu0 0.0
        %1055 = vmatpush1.xpose.msra.mxu0 0.0
        %1056 = vmatprep.mubr.f32.mxu0 0.0
        %1057 = vmatmul.mubr.f32.gmra.mrb[0].mxu0 %v986
        %v1058 = vpop.f32.mrb[0].mxu0
        %v1059 = vadd.f32 0.0, %v1058
        %v1060 = vpop.f32.mrb[0].mxu0
        %1061 = vdwg.mxu0
        %v1062 = vsel %vm895, %v1059, -inf
        %1063 = vmax.xlane.f32.xlu0 %v1062
        %v1064 = vpop.xlane.xlu0 %1063
        %v1065 = vsub.f32 %v1059, %v1064
        %v1066 = vmul.f32 %v1065, 1.442695
        %v1067 = vpow.pop %v1066
        %v1068 = vsel %vm895, %v1067, 0.0
        %1069 = vadd.xlane.f32.xlu0 %v1068
        %v1070 = vpop.xlane.xlu0 %1069
        %v1071 = vrcp.pop %v1070
        %v1072 = vmul.f32 %v1067, %v1071
        %1075 = vrot.lane.b32.xlu0 %v807, 120
        %v1076 = vpop.permute.xlu0 %1075
        %1077 = vrot.lane.b32.xlu0 %v812, 120
        %v1078 = vpop.permute.xlu0 %1077
        %v1082 = vsel %vm895, %v1072, 0
        %1084 = vmatprep.subr.mxu0 0.0
        %1085 = vmatpush1.msra.mxu0 %v1076
        %1086 = vmatprep.subr.mxu0 0.0
        %1087 = vmatpush1.msra.mxu0 %v1078
        %1088 = vmatprep.subr.mxu0 0.0
        %1089 = vmatpush1.msra.mxu0 0.0
        %1090 = vmatprep.subr.mxu0 0.0
        %1091 = vmatpush1.msra.mxu0 0.0
        %1092 = vmatprep.subr.mxu0 0.0
        %1093 = vmatpush1.msra.mxu0 0.0
        %1094 = vmatprep.subr.mxu0 0.0
        %1095 = vmatpush1.msra.mxu0 0.0
        %1096 = vmatprep.subr.mxu0 0.0
        %1097 = vmatpush1.msra.mxu0 0.0
        %1098 = vmatprep.subr.mxu0 0.0
        %1099 = vmatpush1.msra.mxu0 0.0
        %1100 = vmatprep.subr.mxu0 0.0
        %1101 = vmatpush1.msra.mxu0 0.0
        %1102 = vmatprep.subr.mxu0 0.0
        %1103 = vmatpush1.msra.mxu0 0.0
        %1104 = vmatprep.subr.mxu0 0.0
        %1105 = vmatpush1.msra.mxu0 0.0
        %1106 = vmatprep.subr.mxu0 0.0
        %1107 = vmatpush1.msra.mxu0 0.0
        %1108 = vmatprep.subr.mxu0 0.0
        %1109 = vmatpush1.msra.mxu0 0.0
        %1110 = vmatprep.subr.mxu0 0.0
        %1111 = vmatpush1.msra.mxu0 0.0
        %1112 = vmatprep.subr.mxu0 0.0
        %1113 = vmatpush1.msra.mxu0 0.0
        %1114 = vmatprep.subr.mxu0 0.0
        %1115 = vmatpush1.msra.mxu0 0.0
        %1116 = vmatprep.subr.mxu0 0.0
        %1117 = vmatpush1.msra.mxu0 0.0
        %1118 = vmatprep.subr.mxu0 0.0
        %1119 = vmatpush1.msra.mxu0 0.0
        %1120 = vmatprep.subr.mxu0 0.0
        %1121 = vmatpush1.msra.mxu0 0.0
        %1122 = vmatprep.subr.mxu0 0.0
        %1123 = vmatpush1.msra.mxu0 0.0
        %1124 = vmatprep.subr.mxu0 0.0
        %1125 = vmatpush1.msra.mxu0 0.0
        %1126 = vmatprep.subr.mxu0 0.0
        %1127 = vmatpush1.msra.mxu0 0.0
        %1128 = vmatprep.subr.mxu0 0.0
        %1129 = vmatpush1.msra.mxu0 0.0
        %1130 = vmatprep.subr.mxu0 0.0
        %1131 = vmatpush1.msra.mxu0 0.0
        %1132 = vmatprep.subr.mxu0 0.0
        %1133 = vmatpush1.msra.mxu0 0.0
        %1134 = vmatprep.subr.mxu0 0.0
        %1135 = vmatpush1.msra.mxu0 0.0
        %1136 = vmatprep.subr.mxu0 0.0
        %1137 = vmatpush1.msra.mxu0 0.0
        %1138 = vmatprep.subr.mxu0 0.0
        %1139 = vmatpush1.msra.mxu0 0.0
        %1140 = vmatprep.subr.mxu0 0.0
        %1141 = vmatpush1.msra.mxu0 0.0
        %1142 = vmatprep.subr.mxu0 0.0
        %1143 = vmatpush1.msra.mxu0 0.0
        %1144 = vmatprep.subr.mxu0 0.0
        %1145 = vmatpush1.msra.mxu0 0.0
        %1146 = vmatprep.subr.mxu0 0.0
        %1147 = vmatpush1.msra.mxu0 0.0
        %1148 = vmatprep.mubr.f32.mxu0 0.0
        %1149 = vmatmul.mubr.f32.gmra.mrb[0].mxu0 %v1082
        %v1150 = vpop.f32.mrb[0].mxu0
        %v1151 = vadd.f32 0.0, %v1150
        %v1152 = vpop.f32.mrb[0].mxu0
        %1153 = vdwg.mxu0
        %v1154 = vadd.f32 %v906, %v1072
        %1155 = vrot.lane.b32.xlu0 %v640, 112
        %v1156 = vpop.permute.xlu0 %1155
        %1157 = vrot.lane.b32.xlu0 %v724, 112
        %v1158 = vpop.permute.xlu0 %1157
        %1159 = vrot.lane.b32.xlu0 %v729, 112
        %v1160 = vpop.permute.xlu0 %1159
        %v1161 = vsel %vm815, %v1156, 0
        %v1163 = vsel %vm815, %v1158, 0
        %v1165 = vsel %vm815, %v1160, 0
        %1167 = vmatprep.subr.mxu0 0.0
        %1168 = vmatpush1.xpose.msra.mxu0 %v1163
        %1169 = vmatprep.subr.mxu0 0.0
        %1170 = vmatpush1.xpose.msra.mxu0 %v1165
        %1171 = vmatprep.subr.mxu0 0.0
        %1172 = vmatpush1.xpose.msra.mxu0 0.0
        %1173 = vmatprep.subr.mxu0 0.0
        %1174 = vmatpush1.xpose.msra.mxu0 0.0
        %1175 = vmatprep.subr.mxu0 0.0
        %1176 = vmatpush1.xpose.msra.mxu0 0.0
        %1177 = vmatprep.subr.mxu0 0.0
        %1178 = vmatpush1.xpose.msra.mxu0 0.0
        %1179 = vmatprep.subr.mxu0 0.0
        %1180 = vmatpush1.xpose.msra.mxu0 0.0
        %1181 = vmatprep.subr.mxu0 0.0
        %1182 = vmatpush1.xpose.msra.mxu0 0.0
        %1183 = vmatprep.subr.mxu0 0.0
        %1184 = vmatpush1.xpose.msra.mxu0 0.0
        %1185 = vmatprep.subr.mxu0 0.0
        %1186 = vmatpush1.xpose.msra.mxu0 0.0
        %1187 = vmatprep.subr.mxu0 0.0
        %1188 = vmatpush1.xpose.msra.mxu0 0.0
        %1189 = vmatprep.subr.mxu0 0.0
        %1190 = vmatpush1.xpose.msra.mxu0 0.0
        %1191 = vmatprep.subr.mxu0 0.0
        %1192 = vmatpush1.xpose.msra.mxu0 0.0
        %1193 = vmatprep.subr.mxu0 0.0
        %1194 = vmatpush1.xpose.msra.mxu0 0.0
        %1195 = vmatprep.subr.mxu0 0.0
        %1196 = vmatpush1.xpose.msra.mxu0 0.0
        %1197 = vmatprep.subr.mxu0 0.0
        %1198 = vmatpush1.xpose.msra.mxu0 0.0
        %1199 = vmatprep.subr.mxu0 0.0
        %1200 = vmatpush1.xpose.msra.mxu0 0.0
        %1201 = vmatprep.subr.mxu0 0.0
        %1202 = vmatpush1.xpose.msra.mxu0 0.0
        %1203 = vmatprep.subr.mxu0 0.0
        %1204 = vmatpush1.xpose.msra.mxu0 0.0
        %1205 = vmatprep.subr.mxu0 0.0
        %1206 = vmatpush1.xpose.msra.mxu0 0.0
        %1207 = vmatprep.subr.mxu0 0.0
        %1208 = vmatpush1.xpose.msra.mxu0 0.0
        %1209 = vmatprep.subr.mxu0 0.0
        %1210 = vmatpush1.xpose.msra.mxu0 0.0
        %1211 = vmatprep.subr.mxu0 0.0
        %1212 = vmatpush1.xpose.msra.mxu0 0.0
        %1213 = vmatprep.subr.mxu0 0.0
        %1214 = vmatpush1.xpose.msra.mxu0 0.0
        %1215 = vmatprep.subr.mxu0 0.0
        %1216 = vmatpush1.xpose.msra.mxu0 0.0
        %1217 = vmatprep.subr.mxu0 0.0
        %1218 = vmatpush1.xpose.msra.mxu0 0.0
        %1219 = vmatprep.subr.mxu0 0.0
        %1220 = vmatpush1.xpose.msra.mxu0 0.0
        %1221 = vmatprep.subr.mxu0 0.0
        %1222 = vmatpush1.xpose.msra.mxu0 0.0
        %1223 = vmatprep.subr.mxu0 0.0
        %1224 = vmatpush1.xpose.msra.mxu0 0.0
        %1225 = vmatprep.subr.mxu0 0.0
        %1226 = vmatpush1.xpose.msra.mxu0 0.0
        %1227 = vmatprep.subr.mxu0 0.0
        %1228 = vmatpush1.xpose.msra.mxu0 0.0
        %1229 = vmatprep.subr.mxu0 0.0
        %1230 = vmatpush1.xpose.msra.mxu0 0.0
        %1231 = vmatprep.mubr.f32.mxu0 0.0
        %1232 = vmatmul.mubr.f32.gmra.mrb[0].mxu0 %v1161
        %v1233 = vpop.f32.mrb[0].mxu0
        %v1234 = vadd.f32 0.0, %v1233
        %v1235 = vpop.f32.mrb[0].mxu0
        %1236 = vdwg.mxu0
        %v1237 = vsel %vm895, %v1234, -inf
        %1238 = vmax.xlane.f32.xlu0 %v1237
        %v1239 = vpop.xlane.xlu0 %1238
        %v1240 = vsub.f32 %v1234, %v1239
        %v1241 = vmul.f32 %v1240, 1.442695
        %v1242 = vpow.pop %v1241
        %v1243 = vsel %vm895, %v1242, 0.0
        %1244 = vadd.xlane.f32.xlu0 %v1243
        %v1245 = vpop.xlane.xlu0 %1244
        %v1246 = vrcp.pop %v1245
        %v1247 = vmul.f32 %v1242, %v1246
        %1248 = vrot.lane.b32.xlu0 %v807, 112
        %v1249 = vpop.permute.xlu0 %1248
        %1250 = vrot.lane.b32.xlu0 %v812, 112
        %v1251 = vpop.permute.xlu0 %1250
        %v1255 = vsel %vm895, %v1247, 0
        %1257 = vmatprep.subr.mxu0 0.0
        %1258 = vmatpush1.msra.mxu0 %v1249
        %1259 = vmatprep.subr.mxu0 0.0
        %1260 = vmatpush1.msra.mxu0 %v1251
        %1261 = vmatprep.subr.mxu0 0.0
        %1262 = vmatpush1.msra.mxu0 0.0
        %1263 = vmatprep.subr.mxu0 0.0
        %1264 = vmatpush1.msra.mxu0 0.0
        %1265 = vmatprep.subr.mxu0 0.0
        %1266 = vmatpush1.msra.mxu0 0.0
        %1267 = vmatprep.subr.mxu0 0.0
        %1268 = vmatpush1.msra.mxu0 0.0
        %1269 = vmatprep.subr.mxu0 0.0
        %1270 = vmatpush1.msra.mxu0 0.0
        %1271 = vmatprep.subr.mxu0 0.0
        %1272 = vmatpush1.msra.mxu0 0.0
        %1273 = vmatprep.subr.mxu0 0.0
        %1274 = vmatpush1.msra.mxu0 0.0
        %1275 = vmatprep.subr.mxu0 0.0
        %1276 = vmatpush1.msra.mxu0 0.0
        %1277 = vmatprep.subr.mxu0 0.0
        %1278 = vmatpush1.msra.mxu0 0.0
        %1279 = vmatprep.subr.mxu0 0.0
        %1280 = vmatpush1.msra.mxu0 0.0
        %1281 = vmatprep.subr.mxu0 0.0
        %1282 = vmatpush1.msra.mxu0 0.0
        %1283 = vmatprep.subr.mxu0 0.0
        %1284 = vmatpush1.msra.mxu0 0.0
        %1285 = vmatprep.subr.mxu0 0.0
        %1286 = vmatpush1.msra.mxu0 0.0
        %1287 = vmatprep.subr.mxu0 0.0
        %1288 = vmatpush1.msra.mxu0 0.0
        %1289 = vmatprep.subr.mxu0 0.0
        %1290 = vmatpush1.msra.mxu0 0.0
        %1291 = vmatprep.subr.mxu0 0.0
        %1292 = vmatpush1.msra.mxu0 0.0
        %1293 = vmatprep.subr.mxu0 0.0
        %1294 = vmatpush1.msra.mxu0 0.0
        %1295 = vmatprep.subr.mxu0 0.0
        %1296 = vmatpush1.msra.mxu0 0.0
        %1297 = vmatprep.subr.mxu0 0.0
        %1298 = vmatpush1.msra.mxu0 0.0
        %1299 = vmatprep.subr.mxu0 0.0
        %1300 = vmatpush1.msra.mxu0 0.0
        %1301 = vmatprep.subr.mxu0 0.0
        %1302 = vmatpush1.msra.mxu0 0.0
        %1303 = vmatprep.subr.mxu0 0.0
        %1304 = vmatpush1.msra.mxu0 0.0
        %1305 = vmatprep.subr.mxu0 0.0
        %1306 = vmatpush1.msra.mxu0 0.0
        %1307 = vmatprep.subr.mxu0 0.0
        %1308 = vmatpush1.msra.mxu0 0.0
        %1309 = vmatprep.subr.mxu0 0.0
        %1310 = vmatpush1.msra.mxu0 0.0
        %1311 = vmatprep.subr.mxu0 0.0
        %1312 = vmatpush1.msra.mxu0 0.0
        %1313 = vmatprep.subr.mxu0 0.0
        %1314 = vmatpush1.msra.mxu0 0.0
        %1315 = vmatprep.subr.mxu0 0.0
        %1316 = vmatpush1.msra.mxu0 0.0
        %1317 = vmatprep.subr.mxu0 0.0
        %1318 = vmatpush1.msra.mxu0 0.0
        %1319 = vmatprep.subr.mxu0 0.0
        %1320 = vmatpush1.msra.mxu0 0.0
        %1321 = vmatprep.mubr.f32.mxu0 0.0
        %1322 = vmatmul.mubr.f32.gmra.mrb[0].mxu0 %v1255
        %v1323 = vpop.f32.mrb[0].mxu0
        %v1324 = vadd.f32 0.0, %v1323
        %v1325 = vpop.f32.mrb[0].mxu0
        %1326 = vdwg.mxu0
        %v1327 = vadd.f32 %v1154, %v1247
        %1328 = vrot.lane.b32.xlu0 %v640, 104
        %v1329 = vpop.permute.xlu0 %1328
        %1330 = vrot.lane.b32.xlu0 %v724, 104
        %v1331 = vpop.permute.xlu0 %1330
        %1332 = vrot.lane.b32.xlu0 %v729, 104
        %v1333 = vpop.permute.xlu0 %1332
        %v1334 = vsel %vm815, %v1329, 0
        %v1336 = vsel %vm815, %v1331, 0
        %v1338 = vsel %vm815, %v1333, 0
        %1340 = vmatprep.subr.mxu0 0.0
        %1341 = vmatpush1.xpose.msra.mxu0 %v1336
        %1342 = vmatprep.subr.mxu0 0.0
        %1343 = vmatpush1.xpose.msra.mxu0 %v1338
        %1344 = vmatprep.subr.mxu0 0.0
        %1345 = vmatpush1.xpose.msra.mxu0 0.0
        %1346 = vmatprep.subr.mxu0 0.0
        %1347 = vmatpush1.xpose.msra.mxu0 0.0
        %1348 = vmatprep.subr.mxu0 0.0
        %1349 = vmatpush1.xpose.msra.mxu0 0.0
        %1350 = vmatprep.subr.mxu0 0.0
        %1351 = vmatpush1.xpose.msra.mxu0 0.0
        %1352 = vmatprep.subr.mxu0 0.0
        %1353 = vmatpush1.xpose.msra.mxu0 0.0
        %1354 = vmatprep.subr.mxu0 0.0
        %1355 = vmatpush1.xpose.msra.mxu0 0.0
        %1356 = vmatprep.subr.mxu0 0.0
        %1357 = vmatpush1.xpose.msra.mxu0 0.0
        %1358 = vmatprep.subr.mxu0 0.0
        %1359 = vmatpush1.xpose.msra.mxu0 0.0
        %1360 = vmatprep.subr.mxu0 0.0
        %1361 = vmatpush1.xpose.msra.mxu0 0.0
        %1362 = vmatprep.subr.mxu0 0.0
        %1363 = vmatpush1.xpose.msra.mxu0 0.0
        %1364 = vmatprep.subr.mxu0 0.0
        %1365 = vmatpush1.xpose.msra.mxu0 0.0
        %1366 = vmatprep.subr.mxu0 0.0
        %1367 = vmatpush1.xpose.msra.mxu0 0.0
        %1368 = vmatprep.subr.mxu0 0.0
        %1369 = vmatpush1.xpose.msra.mxu0 0.0
        %1370 = vmatprep.subr.mxu0 0.0
        %1371 = vmatpush1.xpose.msra.mxu0 0.0
        %1372 = vmatprep.subr.mxu0 0.0
        %1373 = vmatpush1.xpose.msra.mxu0 0.0
        %1374 = vmatprep.subr.mxu0 0.0
        %1375 = vmatpush1.xpose.msra.mxu0 0.0
        %1376 = vmatprep.subr.mxu0 0.0
        %1377 = vmatpush1.xpose.msra.mxu0 0.0
        %1378 = vmatprep.subr.mxu0 0.0
        %1379 = vmatpush1.xpose.msra.mxu0 0.0
        %1380 = vmatprep.subr.mxu0 0.0
        %1381 = vmatpush1.xpose.msra.mxu0 0.0
        %1382 = vmatprep.subr.mxu0 0.0
        %1383 = vmatpush1.xpose.msra.mxu0 0.0
        %1384 = vmatprep.subr.mxu0 0.0
        %1385 = vmatpush1.xpose.msra.mxu0 0.0
        %1386 = vmatprep.subr.mxu0 0.0
        %1387 = vmatpush1.xpose.msra.mxu0 0.0
        %1388 = vmatprep.subr.mxu0 0.0
        %1389 = vmatpush1.xpose.msra.mxu0 0.0
        %1390 = vmatprep.subr.mxu0 0.0
        %1391 = vmatpush1.xpose.msra.mxu0 0.0
        %1392 = vmatprep.subr.mxu0 0.0
        %1393 = vmatpush1.xpose.msra.mxu0 0.0
        %1394 = vmatprep.subr.mxu0 0.0
        %1395 = vmatpush1.xpose.msra.mxu0 0.0
        %1396 = vmatprep.subr.mxu0 0.0
        %1397 = vmatpush1.xpose.msra.mxu0 0.0
        %1398 = vmatprep.subr.mxu0 0.0
        %1399 = vmatpush1.xpose.msra.mxu0 0.0
        %1400 = vmatprep.subr.mxu0 0.0
        %1401 = vmatpush1.xpose.msra.mxu0 0.0
        %1402 = vmatprep.subr.mxu0 0.0
        %1403 = vmatpush1.xpose.msra.mxu0 0.0
        %1404 = vmatprep.mubr.f32.mxu0 0.0
        %1405 = vmatmul.mubr.f32.gmra.mrb[0].mxu0 %v1334
        %v1406 = vpop.f32.mrb[0].mxu0
        %v1407 = vadd.f32 0.0, %v1406
        %v1408 = vpop.f32.mrb[0].mxu0
        %1409 = vdwg.mxu0
        %v1410 = vsel %vm895, %v1407, -inf
        %1411 = vmax.xlane.f32.xlu0 %v1410
        %v1412 = vpop.xlane.xlu0 %1411
        %v1413 = vsub.f32 %v1407, %v1412
        %v1414 = vmul.f32 %v1413, 1.442695
        %v1415 = vpow.pop %v1414
        %v1416 = vsel %vm895, %v1415, 0.0
        %1417 = vadd.xlane.f32.xlu0 %v1416
        %v1418 = vpop.xlane.xlu0 %1417
        %v1419 = vrcp.pop %v1418
        %v1420 = vmul.f32 %v1415, %v1419
        %1421 = vrot.lane.b32.xlu0 %v807, 104
        %v1422 = vpop.permute.xlu0 %1421
        %1423 = vrot.lane.b32.xlu0 %v812, 104
        %v1424 = vpop.permute.xlu0 %1423
        %v1428 = vsel %vm895, %v1420, 0
        %1430 = vmatprep.subr.mxu0 0.0
        %1431 = vmatpush1.msra.mxu0 %v1422
        %1432 = vmatprep.subr.mxu0 0.0
        %1433 = vmatpush1.msra.mxu0 %v1424
        %1434 = vmatprep.subr.mxu0 0.0
        %1435 = vmatpush1.msra.mxu0 0.0
        %1436 = vmatprep.subr.mxu0 0.0
        %1437 = vmatpush1.msra.mxu0 0.0
        %1438 = vmatprep.subr.mxu0 0.0
        %1439 = vmatpush1.msra.mxu0 0.0
        %1440 = vmatprep.subr.mxu0 0.0
        %1441 = vmatpush1.msra.mxu0 0.0
        %1442 = vmatprep.subr.mxu0 0.0
        %1443 = vmatpush1.msra.mxu0 0.0
        %1444 = vmatprep.subr.mxu0 0.0
        %1445 = vmatpush1.msra.mxu0 0.0
        %1446 = vmatprep.subr.mxu0 0.0
        %1447 = vmatpush1.msra.mxu0 0.0
        %1448 = vmatprep.subr.mxu0 0.0
        %1449 = vmatpush1.msra.mxu0 0.0
        %1450 = vmatprep.subr.mxu0 0.0
        %1451 = vmatpush1.msra.mxu0 0.0
        %1452 = vmatprep.subr.mxu0 0.0
        %1453 = vmatpush1.msra.mxu0 0.0
        %1454 = vmatprep.subr.mxu0 0.0
        %1455 = vmatpush1.msra.mxu0 0.0
        %1456 = vmatprep.subr.mxu0 0.0
        %1457 = vmatpush1.msra.mxu0 0.0
        %1458 = vmatprep.subr.mxu0 0.0
        %1459 = vmatpush1.msra.mxu0 0.0
        %1460 = vmatprep.subr.mxu0 0.0
        %1461 = vmatpush1.msra.mxu0 0.0
        %1462 = vmatprep.subr.mxu0 0.0
        %1463 = vmatpush1.msra.mxu0 0.0
        %1464 = vmatprep.subr.mxu0 0.0
        %1465 = vmatpush1.msra.mxu0 0.0
        %1466 = vmatprep.subr.mxu0 0.0
        %1467 = vmatpush1.msra.mxu0 0.0
        %1468 = vmatprep.subr.mxu0 0.0
        %1469 = vmatpush1.msra.mxu0 0.0
        %1470 = vmatprep.subr.mxu0 0.0
        %1471 = vmatpush1.msra.mxu0 0.0
        %1472 = vmatprep.subr.mxu0 0.0
        %1473 = vmatpush1.msra.mxu0 0.0
        %1474 = vmatprep.subr.mxu0 0.0
        %1475 = vmatpush1.msra.mxu0 0.0
        %1476 = vmatprep.subr.mxu0 0.0
        %1477 = vmatpush1.msra.mxu0 0.0
        %1478 = vmatprep.subr.mxu0 0.0
        %1479 = vmatpush1.msra.mxu0 0.0
        %1480 = vmatprep.subr.mxu0 0.0
        %1481 = vmatpush1.msra.mxu0 0.0
        %1482 = vmatprep.subr.mxu0 0.0
        %1483 = vmatpush1.msra.mxu0 0.0
        %1484 = vmatprep.subr.mxu0 0.0
        %1485 = vmatpush1.msra.mxu0 0.0
        %1486 = vmatprep.subr.mxu0 0.0
        %1487 = vmatpush1.msra.mxu0 0.0
        %1488 = vmatprep.subr.mxu0 0.0
        %1489 = vmatpush1.msra.mxu0 0.0
        %1490 = vmatprep.subr.mxu0 0.0
        %1491 = vmatpush1.msra.mxu0 0.0
        %1492 = vmatprep.subr.mxu0 0.0
        %1493 = vmatpush1.msra.mxu0 0.0
        %1494 = vmatprep.mubr.f32.mxu0 0.0
        %1495 = vmatmul.mubr.f32.gmra.mrb[0].mxu0 %v1428
        %v1496 = vpop.f32.mrb[0].mxu0
        %v1497 = vadd.f32 0.0, %v1496
        %v1498 = vpop.f32.mrb[0].mxu0
        %1499 = vdwg.mxu0
        %v1500 = vadd.f32 %v1327, %v1420
        %1502 = vrot.lane.b32.xlu0 %v1151, 8
        %v1503 = vpop.permute.xlu0 %1502
        %1506 = vrot.lane.b32.xlu0 %v1324, 16
        %v1507 = vpop.permute.xlu0 %1506
        %1510 = vrot.lane.b32.xlu0 %v1497, 24
        %v1511 = vpop.permute.xlu0 %1510
        %v1513 = vsel %vm815, %v977, %v1503
        %v1514 = vsel %vm895, %v1513, %v1507
        %vm1515 = vcmask 195584
        %v1516 = vsel %vm1515, %v1514, %v1511
        %v1518 = vsel %vm569, %v1516, 0
        %1520 = vmatprep.subr.mxu0 0.0
        %1521 = vmatpush1.msra.mxu0 %v557
        %1522 = vmatprep.subr.mxu0 0.0
        %1523 = vmatpush1.msra.mxu0 %v558
        %1524 = vmatprep.subr.mxu0 0.0
        %1525 = vmatpush1.msra.mxu0 %v559
        %1526 = vmatprep.subr.mxu0 0.0
        %1527 = vmatpush1.msra.mxu0 %v560
        %1528 = vmatprep.subr.mxu0 0.0
        %1529 = vmatpush1.msra.mxu0 0.0
        %1530 = vmatprep.subr.mxu0 0.0
        %1531 = vmatpush1.msra.mxu0 0.0
        %1532 = vmatprep.subr.mxu0 0.0
        %1533 = vmatpush1.msra.mxu0 0.0
        %1534 = vmatprep.subr.mxu0 0.0
        %1535 = vmatpush1.msra.mxu0 0.0
        %1536 = vmatprep.subr.mxu0 0.0
        %1537 = vmatpush1.msra.mxu0 0.0
        %1538 = vmatprep.subr.mxu0 0.0
        %1539 = vmatpush1.msra.mxu0 0.0
        %1540 = vmatprep.subr.mxu0 0.0
        %1541 = vmatpush1.msra.mxu0 0.0
        %1542 = vmatprep.subr.mxu0 0.0
        %1543 = vmatpush1.msra.mxu0 0.0
        %1544 = vmatprep.subr.mxu0 0.0
        %1545 = vmatpush1.msra.mxu0 0.0
        %1546 = vmatprep.subr.mxu0 0.0
        %1547 = vmatpush1.msra.mxu0 0.0
        %1548 = vmatprep.subr.mxu0 0.0
        %1549 = vmatpush1.msra.mxu0 0.0
        %1550 = vmatprep.subr.mxu0 0.0
        %1551 = vmatpush1.msra.mxu0 0.0
        %1552 = vmatprep.subr.mxu0 0.0
        %1553 = vmatpush1.msra.mxu0 0.0
        %1554 = vmatprep.subr.mxu0 0.0
        %1555 = vmatpush1.msra.mxu0 0.0
        %1556 = vmatprep.subr.mxu0 0.0
        %1557 = vmatpush1.msra.mxu0 0.0
        %1558 = vmatprep.subr.mxu0 0.0
        %1559 = vmatpush1.msra.mxu0 0.0
        %1560 = vmatprep.subr.mxu0 0.0
        %1561 = vmatpush1.msra.mxu0 0.0
        %1562 = vmatprep.subr.mxu0 0.0
        %1563 = vmatpush1.msra.mxu0 0.0
        %1564 = vmatprep.subr.mxu0 0.0
        %1565 = vmatpush1.msra.mxu0 0.0
        %1566 = vmatprep.subr.mxu0 0.0
        %1567 = vmatpush1.msra.mxu0 0.0
        %1568 = vmatprep.subr.mxu0 0.0
        %1569 = vmatpush1.msra.mxu0 0.0
        %1570 = vmatprep.subr.mxu0 0.0
        %1571 = vmatpush1.msra.mxu0 0.0
        %1572 = vmatprep.subr.mxu0 0.0
        %1573 = vmatpush1.msra.mxu0 0.0
        %1574 = vmatprep.subr.mxu0 0.0
        %1575 = vmatpush1.msra.mxu0 0.0
        %1576 = vmatprep.subr.mxu0 0.0
        %1577 = vmatpush1.msra.mxu0 0.0
        %1578 = vmatprep.subr.mxu0 0.0
        %1579 = vmatpush1.msra.mxu0 0.0
        %1580 = vmatprep.subr.mxu0 0.0
        %1581 = vmatpush1.msra.mxu0 0.0
        %1582 = vmatprep.subr.mxu0 0.0
        %1583 = vmatpush1.msra.mxu0 0.0
        %1584 = vmatprep.mubr.f32.mxu0 0.0
        %1585 = vmatmul.mubr.f32.gmra.mrb[0].mxu0 %v1518
        %v1586 = vpop.f32.mrb[0].mxu0
        %v1587 = vadd.f32 0.0, %v1586
        %v1588 = vpop.f32.mrb[0].mxu0
        %1589 = vdwg.mxu0
        %p1590 = scmp.eq.s32.totalorder %s44, 0
        // Predicated region
        $region85: #{tpu_custom_call.1} parent=59 // pred_check
          %p1591 = pneg %p1590
        $region86: #{tpu_custom_call.1} parent=59 // pred_check_branch
          %1593 = sbr.rel (%p1591) target = $region88
        $region87: #{tpu_custom_call.1} parent=59 // pred_region
          %1594 = vst.msk [vmem:[#allocation2] sm:$0xff] %vm569, %v1587
          %1595 = vst.msk [vmem:[#allocation3] sm:$0xff] %vm895, %v1500
        $region88: #{tpu_custom_call.1} parent=59 // pred_fallthru
          _
        %p1596 = scmp.gt.s32.totalorder %s44, 0
        // Predicated region
        $region89: #{tpu_custom_call.1} parent=59 // pred_check
          %p1597 = pneg %p1596
        $region90: #{tpu_custom_call.1} parent=59 // pred_check_branch
          %1599 = sbr.rel (%p1597) target = $region92
        $region91: #{tpu_custom_call.1} parent=59 // pred_region
          %v1600 = vld [vmem:[#allocation2] sm:$0xff]
          %v1601 = vadd.f32 %v1600, %v1587
          %1602 = vst.msk [vmem:[#allocation2] sm:$0xff] %vm569, %v1601
          %v1603 = vld [vmem:[#allocation3] sm:$0xff]
          %v1604 = vadd.f32 %v1603, %v1500
          %1605 = vst.msk [vmem:[#allocation3] sm:$0xff] %vm895, %v1604
        $region92: #{tpu_custom_call.1} parent=59 // pred_fallthru
          _
        // Predicated region
        $region93: #{tpu_custom_call.1} parent=59 // pred_check
          %p1606 = pneg %p1590
        $region94: #{tpu_custom_call.1} parent=59 // pred_check_branch
          %1608 = sbr.rel (%p1606) target = $region96
        $region95: #{tpu_custom_call.1} parent=59 // pred_region
          %v1609 = vld [vmem:[#allocation2] sm:$0xff]
          %v1610 = vld [vmem:[%s9] sm:$0x1]
          %v1612 = vlaneseq
          %v1613 = vshrl.u32 %v1612, 7
          %v1614 = vsub.s32 0, %v1613
          %v1615 = vrot.slane %v1610, %v1614
          %v1617 = vadd.f32 %v1609, %v1615
          %1618 = vst.msk [vmem:[%s529] sm:$0xff] %vm569, %v1617
          %v1619 = vld [vmem:[#allocation3] sm:$0xff]
          %v1620 = vmul.f32 %v1619, 0.25
          %1621 = vst.msk [vmem:[%s536] sm:$0xff] %vm895, %v1620
        $region96: #{tpu_custom_call.1} parent=59 // pred_fallthru
          _
        %s1622 = sand.u32 %s288, 1
        %s1623 = scalar_lea.sflag [#allocation6], %s1622
        %s1624 = sand.u32 %s288, 1
        %s1625 = smul.addr %s1624, 8
        %s1626 = scalar_lea.vmem [#allocation15], %s1625
        %s1627 = sand.u32 %s316, 1
        %s1628 = scalar_lea.sflag [#allocation17], %s1627
        %s1629 = sand.u32 %s316, 1
        %s1630 = smul.addr %s1629, 8
        %s1631 = scalar_lea.vmem [#allocation16], %s1630
        // Predicated region
        $region97: #{tpu_custom_call.1} parent=59 // pred_check
          %p1632 = pneg %p298
        $region98: #{tpu_custom_call.1} parent=59 // pred_check_branch
          %1634 = sbr.rel (%p1632) target = $region100
        $region99: #{tpu_custom_call.1} parent=59 // pred_region
          %s1636 = ssub.s32 128, 128
          %1637 = vsyncadd %s1623, %s1636
          %s1638 = sadd.s32 %s43, %s42
          %s1639 = smul.addr %s1638, 128
          %s1640 = scalar_lea.hbm %s10, %s1639
          %s1642 = sshll.u32 %s1626, 4
          %s1643 = int_to_ptr.vmem [resolvable:$true] %s1642
          %1645 = dma.vmem_to_hbm [thread:$0]  %s1643, 128, %s1640, %s1623
        $region100: #{tpu_custom_call.1} parent=59 // pred_fallthru
          _
        // Predicated region
        $region101: #{tpu_custom_call.1} parent=59 // pred_check
          %p1646 = pneg %p326
        $region102: #{tpu_custom_call.1} parent=59 // pred_check_branch
          %1648 = sbr.rel (%p1646) target = $region104
        $region103: #{tpu_custom_call.1} parent=59 // pred_region
          %s1650 = ssub.s32 128, 128
          %1651 = vsyncadd %s1628, %s1650
          %s1652 = sadd.s32 %s43, %s42
          %s1653 = smul.addr %s1652, 128
          %s1654 = scalar_lea.hbm %s11, %s1653
          %s1656 = sshll.u32 %s1631, 4
          %s1657 = int_to_ptr.vmem [resolvable:$true] %s1656
          %1659 = dma.vmem_to_hbm [thread:$0]  %s1657, 128, %s1654, %s1628
        $region104: #{tpu_custom_call.1} parent=59 // pred_fallthru
          _
      $region60: #{tpu_custom_call.1} parent=5 // pred_fallthru
        _
      %p1660 = scmp.le.s32.totalorder 2, %s32
      // Predicated region
      $region105: #{tpu_custom_call.1} parent=5 // pred_check
        %p1661 = pneg %p1660
      $region106: #{tpu_custom_call.1} parent=5 // pred_check_branch
        %1663 = sbr.rel (%p1661) target = $region108
      $region107: #{tpu_custom_call.1} parent=5 // pred_region
        %s1664 = ssub.s32 %s32, 2
        // Predicated region
        $region109: #{tpu_custom_call.1} parent=107 // pred_check
          %p1665 = pneg %p304
        $region110: #{tpu_custom_call.1} parent=107 // pred_check_branch
          %1667 = sbr.rel (%p1665) target = $region112
        $region111: #{tpu_custom_call.1} parent=107 // pred_region
          %s1668 = sand.u32 %s289, 1
          %s1669 = scalar_lea.sflag [#allocation6], %s1668
          %s1670 = sand.u32 %s289, 1
          %s1671 = smul.addr %s1670, 8
          %s1672 = scalar_lea.vmem [#allocation15], %s1671
          %1673 = dma.done %s1669, 128
        $region112: #{tpu_custom_call.1} parent=107 // pred_fallthru
          _
        // Predicated region
        $region113: #{tpu_custom_call.1} parent=107 // pred_check
          %p1674 = pneg %p332
        $region114: #{tpu_custom_call.1} parent=107 // pred_check_branch
          %1676 = sbr.rel (%p1674) target = $region116
        $region115: #{tpu_custom_call.1} parent=107 // pred_region
          %s1677 = sand.u32 %s317, 1
          %s1678 = scalar_lea.sflag [#allocation17], %s1677
          %s1679 = sand.u32 %s317, 1
          %s1680 = smul.addr %s1679, 8
          %s1681 = scalar_lea.vmem [#allocation16], %s1680
          %1682 = dma.done %s1678, 128
        $region116: #{tpu_custom_call.1} parent=107 // pred_fallthru
          _
      $region108: #{tpu_custom_call.1} parent=5 // pred_fallthru
        _
    $region6: #{tpu_custom_call.1} parent=1 // loop_footer
      %s36 = sadd.s32 1, %s32
    $region7: #{tpu_custom_call.1} parent=1 // loop_footer_branch
      %31 = sbr.rel target = $region3
    $region8: #{tpu_custom_call.1} parent=1 // loop_exit
      _
    %1683 = vsyncpa [#allocation5], 1
    %s1684 = scalar_lea.sflag [#allocation5], 1
    %1685 = vsyncpa %s1684, 1
    %1686 = vsyncpa [#allocation8], 1
    %s1687 = scalar_lea.sflag [#allocation8], 1
    %1688 = vsyncpa %s1687, 1
    %1689 = vsyncpa [#allocation11], 1
    %1690 = vsyncpa [#allocation14], 1
    %1691 = vsyncpa [#allocation6], 1
    %s1692 = scalar_lea.sflag [#allocation6], 1
    %1693 = vsyncpa %s1692, 1
    %1694 = vsyncpa [#allocation17], 1
    %s1695 = scalar_lea.sflag [#allocation17], 1
    %1696 = vsyncpa %s1695, 1

</llo_original>
